<compile_context>
chip_gen: v5e
topology: v5e:2x2
jax: 0.10.0
libtpu: 0.0.40
codegen_flags: <defaults>
</compile_context>

<pallas_src>
import jax
import jax.numpy as jnp
from jax.experimental import pallas as pl
from jax.experimental.pallas import tpu as pltpu


# ---------------------------------------------------------------------------
# Hardware-aware sizing helpers
# ---------------------------------------------------------------------------
def _vmem_budget_bytes():
    """Per-core VMEM budget, generation aware (v7x 64 MiB, v5e/v6e 128 MiB)."""
    cap = 64 << 20  # conservative fallback == v7x physical per-TC VMEM
    try:
        cap = int(pltpu.get_tpu_info().vmem_capacity_bytes)
    except Exception:
        pass
    if cap <= (64 << 20):
        # v7x: leave headroom for Mosaic internal scratch / spill.
        return min(cap * 3 // 4, 48 << 20)
    # v5e / v6e: 128 MiB physical -> use most of it.
    return min(cap - (16 << 20), 112 << 20)


def _sublane_granule(dtype):
    """Sublane packing granule: 8 for f32, 16 for bf16, 32 for int8/fp8."""
    itemsize = jnp.dtype(dtype).itemsize
    return max(8, 32 // max(itemsize, 1))


def _round_up(x, m):
    return ((x + m - 1) // m) * m


_TILE_B_CANDIDATES = (2048, 1024, 512, 256, 128, 64, 32, 16, 8)


def _choose_tile_b(batch, d, itemsize, tile_budget_bytes, granule):
    """Largest batch tile whose double-buffered x/y tiles fit the budget."""
    cands = [c for c in _TILE_B_CANDIDATES if c % granule == 0]
    fitting = [c for c in cands if 4 * c * d * itemsize <= tile_budget_bytes]
    fit = fitting[0] if fitting else granule
    # Don't blow the batch up by more than one tile of padding.
    covering = [c for c in reversed(cands) if c >= batch]
    if covering:
        fit = min(fit, covering[0])
    return max(fit, granule)


# ---------------------------------------------------------------------------
# Kernels
# ---------------------------------------------------------------------------
def _linear_resident_kernel(x_ref, w_ref, y_ref):
    """y_tile = x_tile @ W_t (weight pre-transposed in the wrapper).

    x_ref : (TILE_B, D) VMEM
    w_ref : (D, D)      VMEM, resident, single-buffered
    y_ref : (TILE_B, D) VMEM
    """
    y_ref[...] = jnp.dot(
        x_ref[...], w_ref[...], preferred_element_type=jnp.float32
    ).astype(y_ref.dtype)


def _linear_ktiled_kernel(x_ref, w_ref, y_ref, acc_ref):
    """K/N-tiled matmul with an f32 VMEM accumulator (k axis is last/arbitrary)."""
    @pl.when(pl.program_id(2) == 0)
    def _():
        acc_ref[...] = jnp.zeros_like(acc_ref)

    acc_ref[...] += jnp.dot(
        x_ref[...], w_ref[...], preferred_element_type=jnp.float32
    )

    @pl.when(pl.program_id(2) == pl.num_programs(2) - 1)
    def _():
        y_ref[...] = acc_ref[...].astype(y_ref.dtype)


# ---------------------------------------------------------------------------
# pallas_call wrappers
# ---------------------------------------------------------------------------
def _call_resident(x_in, w_t, tile_b, vmem_limit, single_buffer_w):
    b_pad, d = x_in.shape
    if single_buffer_w:
        # Constant index_map -> second buffer is pure waste; single-buffer it.
        w_spec = pl.BlockSpec((d, d), lambda i: (0, 0),
                              pipeline_mode=pl.Buffered(1))
    else:
        w_spec = pl.BlockSpec((d, d), lambda i: (0, 0))
    return pl.pallas_call(
        _linear_resident_kernel,
        out_shape=jax.ShapeDtypeStruct((b_pad, d), x_in.dtype),
        grid=(b_pad // tile_b,),
        in_specs=[
            pl.BlockSpec((tile_b, d), lambda i: (i, 0)),   # x: streamed over batch
            w_spec,                                        # W_t: resident
        ],
        out_specs=pl.BlockSpec((tile_b, d), lambda i: (i, 0)),
        compiler_params=pltpu.CompilerParams(
            dimension_semantics=("parallel",),
            vmem_limit_bytes=vmem_limit,
        ),
    )(x_in, w_t)


def _linear_resident(x, w_t, budget):
    b, d = x.shape
    itemsize = jnp.dtype(x.dtype).itemsize
    granule = _sublane_granule(x.dtype)
    headroom = 4 << 20

    avail = budget - headroom - d * d * itemsize
    tile_b = _choose_tile_b(b, d, itemsize, avail, granule)
    b_pad = pl.cdiv(b, tile_b) * tile_b
    x_in = x if b_pad == b else jnp.pad(x, ((0, b_pad - b), (0, 0)))

    # Estimate assumes worst case (double-buffered W) so the fallback also fits.
    est = itemsize * (4 * tile_b * d + 2 * d * d) + headroom
    vmem_limit = int(min(budget, max(est, 16 << 20)))

    try:
        y_pad = _call_resident(x_in, w_t, tile_b, vmem_limit, True)
    except Exception:
        # Fallback if this jax build rejects pipeline_mode / Buffered(1).
        y_pad = _call_resident(x_in, w_t, tile_b, vmem_limit, False)
    return y_pad if b_pad == b else y_pad[:b]


def _linear_ktiled(x, w_t, budget, *, tile_b=512, tile_d=512):
    """x @ w_t with K/N tiling: weight block bounded, f32 accumulator in VMEM."""
    b, d = x.shape
    itemsize = jnp.dtype(x.dtype).itemsize
    granule = _sublane_granule(x.dtype)

    tile_b = max(granule, min(tile_b, _round_up(b, granule)))
    tile_d = max(128, (tile_d // 128) * 128)   # lane-dim blocks must be /128

    b_pad = pl.cdiv(b, tile_b) * tile_b
    d_pad = pl.cdiv(d, tile_d) * tile_d
    x_in = x if (b_pad == b and d_pad == d) else jnp.pad(
        x, ((0, b_pad - b), (0, d_pad - d)))
    w_in = w_t if d_pad == d else jnp.pad(
        w_t, ((0, d_pad - d), (0, d_pad - d)))

    est = (itemsize * (2 * tile_b * tile_d + 2 * tile_d * tile_d
                       + 2 * tile_b * tile_d)
           + 4 * tile_b * tile_d + (4 << 20))
    vmem_limit = int(min(budget, max(est, 16 << 20)))

    y_pad = pl.pallas_call(
        _linear_ktiled_kernel,
        out_shape=jax.ShapeDtypeStruct((b_pad, d_pad), x.dtype),
        grid=(b_pad // tile_b, d_pad // tile_d, d_pad // tile_d),
        in_specs=[
            pl.BlockSpec((tile_b, tile_d), lambda i, j, k: (i, k)),   # x
            pl.BlockSpec((tile_d, tile_d), lambda i, j, k: (k, j)),   # W_t
        ],
        out_specs=pl.BlockSpec((tile_b, tile_d), lambda i, j, k: (i, j)),
        scratch_shapes=[pltpu.VMEM((tile_b, tile_d), jnp.float32)],
        compiler_params=pltpu.CompilerParams(
            dimension_semantics=("parallel", "parallel", "arbitrary"),
            vmem_limit_bytes=vmem_limit,
        ),
    )(x_in, w_in)
    return y_pad[:b, :d]


def _linear_pallas(x, w_t):
    """Compute x @ w_t (weight already transposed) on TPU."""
    b, d = x.shape
    itemsize = jnp.dtype(x.dtype).itemsize
    granule = _sublane_granule(x.dtype)

    # Small problems: lane-sparse output / fixed pallas_call overhead dominate.
    if d < 128 or b * d < 65536:
        return jnp.dot(x, w_t, preferred_element_type=jnp.float32).astype(x.dtype)

    budget = _vmem_budget_bytes()
    headroom = 4 << 20
    resident_min = d * d * itemsize + 4 * granule * d * itemsize + headroom
    if resident_min <= budget:
        return _linear_resident(x, w_t, budget)
    # Weight does not fit resident in VMEM -> K/N-tiled reduction path.
    return _linear_ktiled(x, w_t, budget)


# ---------------------------------------------------------------------------
# BruteForceLayer forward
# ---------------------------------------------------------------------------
def brute_force_layer(x, weight, logpx=None, reverse=False, compute_dtype=None):
    """Forward pass of BruteForceLayer.

    x             : (B, D)
    weight        : (D, D)
    logpx         : optional (B, 1)
    compute_dtype : optional, e.g. jnp.bfloat16 to run the matmul at MXU peak
                    (f32 accumulation); output is cast back to x.dtype.
    """
    _, d = x.shape
    w_f32 = weight.astype(jnp.float32)

    logabsdet = None
    if reverse:
        # One LU factorization gives both inv(W) and log|det W|.
        lu, piv = jax.scipy.linalg.lu_factor(w_f32)
        w_eff = jax.scipy.linalg.lu_solve((lu, piv), jnp.eye(d, dtype=jnp.float32))
        if logpx is not None:
            logabsdet = jnp.sum(jnp.log(jnp.abs(jnp.diagonal(lu))))
        sign = 1.0
    else:
        w_eff = w_f32
        if logpx is not None:
            _, logabsdet = jnp.linalg.slogdet(w_f32)
        sign = -1.0

    # y = x @ W_eff^T.  Transpose hoisted to the wrapper (one-time XLA op) so
    # the per-tile hot loop is a pure MXU contraction with no in-kernel vxpose.
    in_dtype = x.dtype
    cdtype = compute_dtype if compute_dtype is not None else in_dtype
    w_t = jnp.transpose(w_eff).astype(cdtype)
    x_c = x.astype(cdtype)

    y = _linear_pallas(x_c, w_t).astype(in_dtype)

    if logpx is None:
        return y
    # Scalar logdet adjustment: one elementwise add in the wrapper instead of
    # dragging a lane-sparse (B, 1) tensor through the kernel.
    logp = logpx + sign * logabsdet.astype(logpx.dtype)
    return y, logp


if __name__ == "__main__":
    key = jax.random.PRNGKey(0)
    k_x, k_lp, k_w, k_x2, k_w2, k_x3, k_w3 = jax.random.split(key, 7)

    # ---- small shapes consistent with the module (small-D XLA fallback) ----
    B, D = 8, 32
    weight = jnp.eye(D, dtype=jnp.float32) + 0.01 * jax.random.normal(
        k_w, (D, D), jnp.float32)
    x = jax.random.normal(k_x, (B, D), jnp.float32)
    logpx = jax.random.normal(k_lp, (B, 1), jnp.float32)

    y, logp = brute_force_layer(x, weight, logpx=logpx, reverse=False)
    jax.block_until_ready((y, logp))
    x_rec = brute_force_layer(y, weight, reverse=True)
    jax.block_until_ready(x_rec)

    _, lad = jnp.linalg.slogdet(weight)
    assert jnp.allclose(y, x @ weight.T, atol=1e-5)
    assert jnp.allclose(logp, logpx - lad, atol=1e-5)
    assert jnp.allclose(x_rec, x, atol=1e-3)

    # ---- Pallas resident-weight path (batch grid, padding, parallel axis) ----
    B2, D2 = 1000, 128
    w2 = jnp.eye(D2, dtype=jnp.float32) + 0.01 * jax.random.normal(
        k_w2, (D2, D2), jnp.float32)
    x2 = jax.random.normal(k_x2, (B2, D2), jnp.float32)
    y2 = brute_force_layer(x2, w2)
    jax.block_until_ready(y2)
    assert jnp.allclose(y2, x2 @ w2.T, atol=1e-3)

    # ---- K/N-tiled reduction path (exercised directly with small tiles) ----
    B3, D3 = 256, 384
    w3 = jnp.eye(D3, dtype=jnp.float32) + 0.01 * jax.random.normal(
        k_w3, (D3, D3), jnp.float32)
    x3 = jax.random.normal(k_x3, (B3, D3), jnp.float32)
    y3 = _linear_ktiled(x3, jnp.transpose(w3), _vmem_budget_bytes(),
                        tile_b=128, tile_d=128)
    jax.block_until_ready(y3)
    assert jnp.allclose(y3, x3 @ w3.T, atol=1e-3)

    # ---- opt-in bf16 compute mode (MXU-peak path, f32 accumulation) ----
    y2_bf16 = brute_force_layer(x2, w2, compute_dtype=jnp.bfloat16)
    jax.block_until_ready(y2_bf16)
    assert jnp.allclose(y2_bf16, x2 @ w2.T, atol=5e-2, rtol=5e-2)

    print("KERNEL_OK")
</pallas_src>

<mosaic_0001>
module attributes {stable_mosaic.version = 11 : i64} {
  func.func @_linear_resident_kernel(%arg0: i32, %arg1: memref<1024x128xf32, #tpu.memory_space<vmem>>, %arg2: memref<128x128xf32, #tpu.memory_space<vmem>>, %arg3: memref<1024x128xf32, #tpu.memory_space<vmem>>) attributes {dimension_semantics = [#tpu.dimension_semantics<parallel>], iteration_bounds = array<i64: 1>, scalar_prefetch = 0 : i64, scratch_operands = 0 : i64, tpu.core_type = #tpu.core_type<tc>, window_params = [{transform_indices = @transform_0, window_bounds = array<i64: 1024, 128>}, {pipeline_mode = #tpu.pipeline_mode<synchronous>, transform_indices = @transform_1, window_bounds = array<i64: 128, 128>}, {transform_indices = @transform_2, window_bounds = array<i64: 1024, 128>}]} {
    %c0 = arith.constant 0 : index
    %c0_0 = arith.constant 0 : index
    %0 = vector.load %arg1[%c0, %c0_0] : memref<1024x128xf32, #tpu.memory_space<vmem>>, vector<1024x128xf32>
    %c0_1 = arith.constant 0 : index
    %c0_2 = arith.constant 0 : index
    %1 = vector.load %arg2[%c0_1, %c0_2] : memref<128x128xf32, #tpu.memory_space<vmem>>, vector<128x128xf32>
    %cst = arith.constant dense<0.000000e+00> : vector<1024x128xf32>
    %2 = tpu.matmul %0, %1, %cst {dimension_numbers = #tpu.dot_dimension_numbers<[1], [0], [0], [1], [0, 0, 1, 1], [], []>} : vector<1024x128xf32>, vector<128x128xf32>, vector<1024x128xf32> -> vector<1024x128xf32>
    %c0_3 = arith.constant 0 : index
    %c0_4 = arith.constant 0 : index
    %3 = vector.load %arg3[%c0_3, %c0_4] : memref<1024x128xf32, #tpu.memory_space<vmem>>, vector<1024x128xf32>
    tpu.vector_store %arg3[%c0_3, %c0_4], %2 {strides = array<i32>} : memref<1024x128xf32, #tpu.memory_space<vmem>>, vector<1024x128xf32>,
    return
  }
  func.func @transform_0(%arg0: i32) -> (i32, i32) {
    %c0_i32 = arith.constant 0 : i32
    %c0_i32_0 = arith.constant 0 : i32
    return %arg0, %c0_i32 : i32, i32
  }
  func.func @transform_1(%arg0: i32) -> (i32, i32) {
    %c0_i32 = arith.constant 0 : i32
    %c0_i32_0 = arith.constant 0 : i32
    %c0_i32_1 = arith.constant 0 : i32
    return %c0_i32, %c0_i32_0 : i32, i32
  }
  func.func @transform_2(%arg0: i32) -> (i32, i32) {
    %c0_i32 = arith.constant 0 : i32
    %c0_i32_0 = arith.constant 0 : i32
    return %arg0, %c0_i32 : i32, i32
  }
}

module attributes {stable_mosaic.version = 11 : i64} {
  func.func @_linear_resident_kernel(%arg0: i32, %arg1: memref<1024x128xf32, #tpu.memory_space<vmem>>, %arg2: memref<128x128xf32, #tpu.memory_space<vmem>>, %arg3: memref<1024x128xf32, #tpu.memory_space<vmem>>) attributes {dimension_semantics = [#tpu.dimension_semantics<parallel>], iteration_bounds = array<i64: 1>, scalar_prefetch = 0 : i64, scratch_operands = 0 : i64, tpu.core_type = #tpu.core_type<tc>, window_params = [{transform_indices = @transform_0, window_bounds = array<i64: 1024, 128>}, {pipeline_mode = #tpu.pipeline_mode<synchronous>, transform_indices = @transform_1, window_bounds = array<i64: 128, 128>}, {transform_indices = @transform_2, window_bounds = array<i64: 1024, 128>}]} {
    %c0 = arith.constant 0 : index
    %c0_0 = arith.constant 0 : index
    %0 = vector.load %arg1[%c0, %c0_0] : memref<1024x128xf32, #tpu.memory_space<vmem>>, vector<1024x128xf32>
    %c0_1 = arith.constant 0 : index
    %c0_2 = arith.constant 0 : index
    %1 = vector.load %arg2[%c0_1, %c0_2] : memref<128x128xf32, #tpu.memory_space<vmem>>, vector<128x128xf32>
    %cst = arith.constant dense<0.000000e+00> : vector<1024x128xf32>
    %2 = tpu.matmul %0, %1, %cst {dimension_numbers = #tpu.dot_dimension_numbers<[1], [0], [0], [1], [0, 0, 1, 1], [], []>} : vector<1024x128xf32>, vector<128x128xf32>, vector<1024x128xf32> -> vector<1024x128xf32>
    %c0_3 = arith.constant 0 : index
    %c0_4 = arith.constant 0 : index
    %3 = vector.load %arg3[%c0_3, %c0_4] : memref<1024x128xf32, #tpu.memory_space<vmem>>, vector<1024x128xf32>
    tpu.vector_store %arg3[%c0_3, %c0_4], %2 {strides = array<i32>} : memref<1024x128xf32, #tpu.memory_space<vmem>>, vector<1024x128xf32>,
    return
  }
  func.func @transform_0(%arg0: i32) -> (i32, i32) {
    %c0_i32 = arith.constant 0 : i32
    %c0_i32_0 = arith.constant 0 : i32
    return %arg0, %c0_i32 : i32, i32
  }
  func.func @transform_1(%arg0: i32) -> (i32, i32) {
    %c0_i32 = arith.constant 0 : i32
    %c0_i32_0 = arith.constant 0 : i32
    %c0_i32_1 = arith.constant 0 : i32
    return %c0_i32, %c0_i32_0 : i32, i32
  }
  func.func @transform_2(%arg0: i32) -> (i32, i32) {
    %c0_i32 = arith.constant 0 : i32
    %c0_i32_0 = arith.constant 0 : i32
    return %arg0, %c0_i32 : i32, i32
  }
}

</mosaic_0001>

<llo_original>
// kernel: tpu_custom_call.1
$region0: #{tpu_custom_call.1}
  #allocation0 [shape = 'u32[]', space=smem, size = 0x4, offset = 0x4, fixed_abs, tag = 'smem constant byte address 0x4 - core index']
  #allocation1 [shape = 'u32[72,128]{1,0:T(1,128)}', space=vmem, size = 0x9000, scoped, tag = 'internal scratch']
  %s0 = inlined_call_operand.hbm [shape: f32[1024,128], index: 0, kind: input, shape index: {}]
  %s1 = inlined_call_operand.hbm [shape: f32[128,128], index: 1, kind: input, shape index: {}]
  %s2 = inlined_call_operand.hbm [shape: f32[1024,128], index: 2, kind: output, shape index: {}]
  %s3 = sld [smem:[#allocation0]]
  $region26: #{tpu_custom_call.1} parent=0
    _
  %s5 = ssub.s32 1, %s3
  %s6 = scalar_select 0, %s5, %s3
  $region1: #{tpu_custom_call.1} parent=0
    #allocation2 [shape = 'u8[524288]{0}', space=vmem, size = 0x80000, scoped, tag = 'input window, operand 0, single buffered']
    #allocation3 [shape = 's32[1]{0}', space=sflag, size = 0x4, scoped, tag = 'scoped memory for tpu_custom_call.1']
    #allocation4 [shape = 's32[1]{0}', space=sflag, size = 0x4, scoped, tag = 'scoped memory for tpu_custom_call.1']
    #allocation5 [shape = 'u8[65536]{0}', space=vmem, size = 0x10000, scoped, tag = 'input window, operand 1, single buffered']
    #allocation6 [shape = 's32[1]{0}', space=sflag, size = 0x4, scoped, tag = 'scoped memory for tpu_custom_call.1']
    #allocation7 [shape = 'u8[524288]{0}', space=vmem, size = 0x80000, scoped, tag = 'output window, operand 0, single buffered']
    %7 = vsyncpa [#allocation3], 0
    %8 = vsyncpa [#allocation6], 0
    %9 = vsyncpa [#allocation4], 0
    // Predicated region
    $region2: #{tpu_custom_call.1} parent=1 // pred_check
      _
    $region3: #{tpu_custom_call.1} parent=1 // pred_check_branch
      %11 = sbr.rel (0) target = $region5
    $region4: #{tpu_custom_call.1} parent=1 // pred_region
      %13 = vsyncadd [#allocation3], 0
      %s14 = sshll.u32 %s0, 4
      %s15 = int_to_ptr.hbm [resolvable:$true] %s14
      %s16 = sshll.u32 [#allocation2], 4
      %s17 = int_to_ptr.vmem [resolvable:$true] %s16
      %22 = dma.hbm_to_vmem [thread:$0]  %s15, 16384, %s17, [#allocation3], 128, 128, 8
    $region5: #{tpu_custom_call.1} parent=1 // pred_fallthru
      _
    // Predicated region
    $region6: #{tpu_custom_call.1} parent=1 // pred_check
      _
    $region7: #{tpu_custom_call.1} parent=1 // pred_check_branch
      %24 = sbr.rel (0) target = $region9
    $region8: #{tpu_custom_call.1} parent=1 // pred_region
      %26 = vsyncadd [#allocation6], 0
      %s27 = sshll.u32 %s1, 4
      %s28 = int_to_ptr.hbm [resolvable:$true] %s27
      %s29 = sshll.u32 [#allocation5], 4
      %s30 = int_to_ptr.vmem [resolvable:$true] %s29
      %35 = dma.hbm_to_vmem [thread:$0]  %s28, 2048, %s30, [#allocation6], 128, 128, 8
    $region9: #{tpu_custom_call.1} parent=1 // pred_fallthru
      _
    // Predicated region
    $region10: #{tpu_custom_call.1} parent=1 // pred_check
      _
    $region11: #{tpu_custom_call.1} parent=1 // pred_check_branch
      %37 = sbr.rel (0) target = $region13
    $region12: #{tpu_custom_call.1} parent=1 // pred_region
      %39 = dma.done [#allocation3], 16384
    $region13: #{tpu_custom_call.1} parent=1 // pred_fallthru
      _
    // Predicated region
    $region14: #{tpu_custom_call.1} parent=1 // pred_check
      _
    $region15: #{tpu_custom_call.1} parent=1 // pred_check_branch
      %41 = sbr.rel (0) target = $region17
    $region16: #{tpu_custom_call.1} parent=1 // pred_region
      %43 = dma.done [#allocation6], 2048
    $region17: #{tpu_custom_call.1} parent=1 // pred_fallthru
      _
    %v44 = vld [vmem:[#allocation2] sm:$0xff]
    %v45 = vld [vmem:[#allocation2 + $0x8] sm:$0xff]
    %v46 = vld [vmem:[#allocation2 + $0x10] sm:$0xff]
    %v47 = vld [vmem:[#allocation2 + $0x18] sm:$0xff]
    %v48 = vld [vmem:[#allocation2 + $0x20] sm:$0xff]
    %v49 = vld [vmem:[#allocation2 + $0x28] sm:$0xff]
    %v50 = vld [vmem:[#allocation2 + $0x30] sm:$0xff]
    %v51 = vld [vmem:[#allocation2 + $0x38] sm:$0xff]
    %v52 = vld [vmem:[#allocation2 + $0x40] sm:$0xff]
    %v53 = vld [vmem:[#allocation2 + $0x48] sm:$0xff]
    %v54 = vld [vmem:[#allocation2 + $0x50] sm:$0xff]
    %v55 = vld [vmem:[#allocation2 + $0x58] sm:$0xff]
    %v56 = vld [vmem:[#allocation2 + $0x60] sm:$0xff]
    %v57 = vld [vmem:[#allocation2 + $0x68] sm:$0xff]
    %v58 = vld [vmem:[#allocation2 + $0x70] sm:$0xff]
    %v59 = vld [vmem:[#allocation2 + $0x78] sm:$0xff]
    %v60 = vld [vmem:[#allocation2 + $0x80] sm:$0xff]
    %v61 = vld [vmem:[#allocation2 + $0x88] sm:$0xff]
    %v62 = vld [vmem:[#allocation2 + $0x90] sm:$0xff]
    %v63 = vld [vmem:[#allocation2 + $0x98] sm:$0xff]
    %v64 = vld [vmem:[#allocation2 + $0xa0] sm:$0xff]
    %v65 = vld [vmem:[#allocation2 + $0xa8] sm:$0xff]
    %v66 = vld [vmem:[#allocation2 + $0xb0] sm:$0xff]
    %v67 = vld [vmem:[#allocation2 + $0xb8] sm:$0xff]
    %v68 = vld [vmem:[#allocation2 + $0xc0] sm:$0xff]
    %v69 = vld [vmem:[#allocation2 + $0xc8] sm:$0xff]
    %v70 = vld [vmem:[#allocation2 + $0xd0] sm:$0xff]
    %v71 = vld [vmem:[#allocation2 + $0xd8] sm:$0xff]
    %v72 = vld [vmem:[#allocation2 + $0xe0] sm:$0xff]
    %v73 = vld [vmem:[#allocation2 + $0xe8] sm:$0xff]
    %v74 = vld [vmem:[#allocation2 + $0xf0] sm:$0xff]
    %v75 = vld [vmem:[#allocation2 + $0xf8] sm:$0xff]
    %v76 = vld [vmem:[#allocation2 + $0x100] sm:$0xff]
    %v77 = vld [vmem:[#allocation2 + $0x108] sm:$0xff]
    %v78 = vld [vmem:[#allocation2 + $0x110] sm:$0xff]
    %v79 = vld [vmem:[#allocation2 + $0x118] sm:$0xff]
    %v80 = vld [vmem:[#allocation2 + $0x120] sm:$0xff]
    %v81 = vld [vmem:[#allocation2 + $0x128] sm:$0xff]
    %v82 = vld [vmem:[#allocation2 + $0x130] sm:$0xff]
    %v83 = vld [vmem:[#allocation2 + $0x138] sm:$0xff]
    %v84 = vld [vmem:[#allocation2 + $0x140] sm:$0xff]
    %v85 = vld [vmem:[#allocation2 + $0x148] sm:$0xff]
    %v86 = vld [vmem:[#allocation2 + $0x150] sm:$0xff]
    %v87 = vld [vmem:[#allocation2 + $0x158] sm:$0xff]
    %v88 = vld [vmem:[#allocation2 + $0x160] sm:$0xff]
    %v89 = vld [vmem:[#allocation2 + $0x168] sm:$0xff]
    %v90 = vld [vmem:[#allocation2 + $0x170] sm:$0xff]
    %v91 = vld [vmem:[#allocation2 + $0x178] sm:$0xff]
    %v92 = vld [vmem:[#allocation2 + $0x180] sm:$0xff]
    %v93 = vld [vmem:[#allocation2 + $0x188] sm:$0xff]
    %v94 = vld [vmem:[#allocation2 + $0x190] sm:$0xff]
    %v95 = vld [vmem:[#allocation2 + $0x198] sm:$0xff]
    %v96 = vld [vmem:[#allocation2 + $0x1a0] sm:$0xff]
    %v97 = vld [vmem:[#allocation2 + $0x1a8] sm:$0xff]
    %v98 = vld [vmem:[#allocation2 + $0x1b0] sm:$0xff]
    %v99 = vld [vmem:[#allocation2 + $0x1b8] sm:$0xff]
    %v100 = vld [vmem:[#allocation2 + $0x1c0] sm:$0xff]
    %v101 = vld [vmem:[#allocation2 + $0x1c8] sm:$0xff]
    %v102 = vld [vmem:[#allocation2 + $0x1d0] sm:$0xff]
    %v103 = vld [vmem:[#allocation2 + $0x1d8] sm:$0xff]
    %v104 = vld [vmem:[#allocation2 + $0x1e0] sm:$0xff]
    %v105 = vld [vmem:[#allocation2 + $0x1e8] sm:$0xff]
    %v106 = vld [vmem:[#allocation2 + $0x1f0] sm:$0xff]
    %v107 = vld [vmem:[#allocation2 + $0x1f8] sm:$0xff]
    %v108 = vld [vmem:[#allocation2 + $0x200] sm:$0xff]
    %v109 = vld [vmem:[#allocation2 + $0x208] sm:$0xff]
    %v110 = vld [vmem:[#allocation2 + $0x210] sm:$0xff]
    %v111 = vld [vmem:[#allocation2 + $0x218] sm:$0xff]
    %v112 = vld [vmem:[#allocation2 + $0x220] sm:$0xff]
    %v113 = vld [vmem:[#allocation2 + $0x228] sm:$0xff]
    %v114 = vld [vmem:[#allocation2 + $0x230] sm:$0xff]
    %v115 = vld [vmem:[#allocation2 + $0x238] sm:$0xff]
    %v116 = vld [vmem:[#allocation2 + $0x240] sm:$0xff]
    %v117 = vld [vmem:[#allocation2 + $0x248] sm:$0xff]
    %v118 = vld [vmem:[#allocation2 + $0x250] sm:$0xff]
    %v119 = vld [vmem:[#allocation2 + $0x258] sm:$0xff]
    %v120 = vld [vmem:[#allocation2 + $0x260] sm:$0xff]
    %v121 = vld [vmem:[#allocation2 + $0x268] sm:$0xff]
    %v122 = vld [vmem:[#allocation2 + $0x270] sm:$0xff]
    %v123 = vld [vmem:[#allocation2 + $0x278] sm:$0xff]
    %v124 = vld [vmem:[#allocation2 + $0x280] sm:$0xff]
    %v125 = vld [vmem:[#allocation2 + $0x288] sm:$0xff]
    %v126 = vld [vmem:[#allocation2 + $0x290] sm:$0xff]
    %v127 = vld [vmem:[#allocation2 + $0x298] sm:$0xff]
    %v128 = vld [vmem:[#allocation2 + $0x2a0] sm:$0xff]
    %v129 = vld [vmem:[#allocation2 + $0x2a8] sm:$0xff]
    %v130 = vld [vmem:[#allocation2 + $0x2b0] sm:$0xff]
    %v131 = vld [vmem:[#allocation2 + $0x2b8] sm:$0xff]
    %v132 = vld [vmem:[#allocation2 + $0x2c0] sm:$0xff]
    %v133 = vld [vmem:[#allocation2 + $0x2c8] sm:$0xff]
    %v134 = vld [vmem:[#allocation2 + $0x2d0] sm:$0xff]
    %v135 = vld [vmem:[#allocation2 + $0x2d8] sm:$0xff]
    %v136 = vld [vmem:[#allocation2 + $0x2e0] sm:$0xff]
    %v137 = vld [vmem:[#allocation2 + $0x2e8] sm:$0xff]
    %v138 = vld [vmem:[#allocation2 + $0x2f0] sm:$0xff]
    %v139 = vld [vmem:[#allocation2 + $0x2f8] sm:$0xff]
    %v140 = vld [vmem:[#allocation2 + $0x300] sm:$0xff]
    %v141 = vld [vmem:[#allocation2 + $0x308] sm:$0xff]
    %v142 = vld [vmem:[#allocation2 + $0x310] sm:$0xff]
    %v143 = vld [vmem:[#allocation2 + $0x318] sm:$0xff]
    %v144 = vld [vmem:[#allocation2 + $0x320] sm:$0xff]
    %v145 = vld [vmem:[#allocation2 + $0x328] sm:$0xff]
    %v146 = vld [vmem:[#allocation2 + $0x330] sm:$0xff]
    %v147 = vld [vmem:[#allocation2 + $0x338] sm:$0xff]
    %v148 = vld [vmem:[#allocation2 + $0x340] sm:$0xff]
    %v149 = vld [vmem:[#allocation2 + $0x348] sm:$0xff]
    %v150 = vld [vmem:[#allocation2 + $0x350] sm:$0xff]
    %v151 = vld [vmem:[#allocation2 + $0x358] sm:$0xff]
    %v152 = vld [vmem:[#allocation2 + $0x360] sm:$0xff]
    %v153 = vld [vmem:[#allocation2 + $0x368] sm:$0xff]
    %v154 = vld [vmem:[#allocation2 + $0x370] sm:$0xff]
    %v155 = vld [vmem:[#allocation2 + $0x378] sm:$0xff]
    %v156 = vld [vmem:[#allocation2 + $0x380] sm:$0xff]
    %v157 = vld [vmem:[#allocation2 + $0x388] sm:$0xff]
    %v158 = vld [vmem:[#allocation2 + $0x390] sm:$0xff]
    %v159 = vld [vmem:[#allocation2 + $0x398] sm:$0xff]
    %v160 = vld [vmem:[#allocation2 + $0x3a0] sm:$0xff]
    %v161 = vld [vmem:[#allocation2 + $0x3a8] sm:$0xff]
    %v162 = vld [vmem:[#allocation2 + $0x3b0] sm:$0xff]
    %v163 = vld [vmem:[#allocation2 + $0x3b8] sm:$0xff]
    %v164 = vld [vmem:[#allocation2 + $0x3c0] sm:$0xff]
    %v165 = vld [vmem:[#allocation2 + $0x3c8] sm:$0xff]
    %v166 = vld [vmem:[#allocation2 + $0x3d0] sm:$0xff]
    %v167 = vld [vmem:[#allocation2 + $0x3d8] sm:$0xff]
    %v168 = vld [vmem:[#allocation2 + $0x3e0] sm:$0xff]
    %v169 = vld [vmem:[#allocation2 + $0x3e8] sm:$0xff]
    %v170 = vld [vmem:[#allocation2 + $0x3f0] sm:$0xff]
    %v171 = vld [vmem:[#allocation2 + $0x3f8] sm:$0xff]
    %v172 = vld [vmem:[#allocation5] sm:$0xff]
    %v173 = vld [vmem:[#allocation5 + $0x8] sm:$0xff]
    %v174 = vld [vmem:[#allocation5 + $0x10] sm:$0xff]
    %v175 = vld [vmem:[#allocation5 + $0x18] sm:$0xff]
    %v176 = vld [vmem:[#allocation5 + $0x20] sm:$0xff]
    %v177 = vld [vmem:[#allocation5 + $0x28] sm:$0xff]
    %v178 = vld [vmem:[#allocation5 + $0x30] sm:$0xff]
    %v179 = vld [vmem:[#allocation5 + $0x38] sm:$0xff]
    %v180 = vld [vmem:[#allocation5 + $0x40] sm:$0xff]
    %v181 = vld [vmem:[#allocation5 + $0x48] sm:$0xff]
    %v182 = vld [vmem:[#allocation5 + $0x50] sm:$0xff]
    %v183 = vld [vmem:[#allocation5 + $0x58] sm:$0xff]
    %v184 = vld [vmem:[#allocation5 + $0x60] sm:$0xff]
    %v185 = vld [vmem:[#allocation5 + $0x68] sm:$0xff]
    %v186 = vld [vmem:[#allocation5 + $0x70] sm:$0xff]
    %v187 = vld [vmem:[#allocation5 + $0x78] sm:$0xff]
    %188 = vmatpush.msra.mxu0 %v187
    %189 = vmatpush.msra.mxu0 %v186
    %190 = vmatpush.msra.mxu0 %v185
    %191 = vmatpush.msra.mxu0 %v184
    %192 = vmatpush.msra.mxu0 %v183
    %193 = vmatpush.msra.mxu0 %v182
    %194 = vmatpush.msra.mxu0 %v181
    %195 = vmatpush.msra.mxu0 %v180
    %196 = vmatpush.msra.mxu0 %v179
    %197 = vmatpush.msra.mxu0 %v178
    %198 = vmatpush.msra.mxu0 %v177
    %199 = vmatpush.msra.mxu0 %v176
    %200 = vmatpush.msra.mxu0 %v175
    %201 = vmatpush.msra.mxu0 %v174
    %202 = vmatpush.msra.mxu0 %v173
    %203 = vmatpush.msra.mxu0 %v172
    %204 = vmatmul.f32.gmra.mxu0 %v44
    %v205 = vpop.f32.mrf.mxu0
    %v206 = vadd.f32 0.0, %v205
    %207 = vmatmul.f32.gmra.mxu0 %v45
    %v208 = vpop.f32.mrf.mxu0
    %v209 = vadd.f32 0.0, %v208
    %210 = vmatmul.f32.gmra.mxu0 %v46
    %v211 = vpop.f32.mrf.mxu0
    %v212 = vadd.f32 0.0, %v211
    %213 = vmatmul.f32.gmra.mxu0 %v47
    %v214 = vpop.f32.mrf.mxu0
    %v215 = vadd.f32 0.0, %v214
    %216 = vmatmul.f32.gmra.mxu0 %v48
    %v217 = vpop.f32.mrf.mxu0
    %v218 = vadd.f32 0.0, %v217
    %219 = vmatmul.f32.gmra.mxu0 %v49
    %v220 = vpop.f32.mrf.mxu0
    %v221 = vadd.f32 0.0, %v220
    %222 = vmatmul.f32.gmra.mxu0 %v50
    %v223 = vpop.f32.mrf.mxu0
    %v224 = vadd.f32 0.0, %v223
    %225 = vmatmul.f32.gmra.mxu0 %v51
    %v226 = vpop.f32.mrf.mxu0
    %v227 = vadd.f32 0.0, %v226
    %228 = vmatmul.f32.gmra.mxu0 %v52
    %v229 = vpop.f32.mrf.mxu0
    %v230 = vadd.f32 0.0, %v229
    %231 = vmatmul.f32.gmra.mxu0 %v53
    %v232 = vpop.f32.mrf.mxu0
    %v233 = vadd.f32 0.0, %v232
    %234 = vmatmul.f32.gmra.mxu0 %v54
    %v235 = vpop.f32.mrf.mxu0
    %v236 = vadd.f32 0.0, %v235
    %237 = vmatmul.f32.gmra.mxu0 %v55
    %v238 = vpop.f32.mrf.mxu0
    %v239 = vadd.f32 0.0, %v238
    %240 = vmatmul.f32.gmra.mxu0 %v56
    %v241 = vpop.f32.mrf.mxu0
    %v242 = vadd.f32 0.0, %v241
    %243 = vmatmul.f32.gmra.mxu0 %v57
    %v244 = vpop.f32.mrf.mxu0
    %v245 = vadd.f32 0.0, %v244
    %246 = vmatmul.f32.gmra.mxu0 %v58
    %v247 = vpop.f32.mrf.mxu0
    %v248 = vadd.f32 0.0, %v247
    %249 = vmatmul.f32.gmra.mxu0 %v59
    %v250 = vpop.f32.mrf.mxu0
    %v251 = vadd.f32 0.0, %v250
    %252 = vmatmul.f32.gmra.mxu0 %v60
    %v253 = vpop.f32.mrf.mxu0
    %v254 = vadd.f32 0.0, %v253
    %255 = vmatmul.f32.gmra.mxu0 %v61
    %v256 = vpop.f32.mrf.mxu0
    %v257 = vadd.f32 0.0, %v256
    %258 = vmatmul.f32.gmra.mxu0 %v62
    %v259 = vpop.f32.mrf.mxu0
    %v260 = vadd.f32 0.0, %v259
    %261 = vmatmul.f32.gmra.mxu0 %v63
    %v262 = vpop.f32.mrf.mxu0
    %v263 = vadd.f32 0.0, %v262
    %264 = vmatmul.f32.gmra.mxu0 %v64
    %v265 = vpop.f32.mrf.mxu0
    %v266 = vadd.f32 0.0, %v265
    %267 = vmatmul.f32.gmra.mxu0 %v65
    %v268 = vpop.f32.mrf.mxu0
    %v269 = vadd.f32 0.0, %v268
    %270 = vmatmul.f32.gmra.mxu0 %v66
    %v271 = vpop.f32.mrf.mxu0
    %v272 = vadd.f32 0.0, %v271
    %273 = vmatmul.f32.gmra.mxu0 %v67
    %v274 = vpop.f32.mrf.mxu0
    %v275 = vadd.f32 0.0, %v274
    %276 = vmatmul.f32.gmra.mxu0 %v68
    %v277 = vpop.f32.mrf.mxu0
    %v278 = vadd.f32 0.0, %v277
    %279 = vmatmul.f32.gmra.mxu0 %v69
    %v280 = vpop.f32.mrf.mxu0
    %v281 = vadd.f32 0.0, %v280
    %282 = vmatmul.f32.gmra.mxu0 %v70
    %v283 = vpop.f32.mrf.mxu0
    %v284 = vadd.f32 0.0, %v283
    %285 = vmatmul.f32.gmra.mxu0 %v71
    %v286 = vpop.f32.mrf.mxu0
    %v287 = vadd.f32 0.0, %v286
    %288 = vmatmul.f32.gmra.mxu0 %v72
    %v289 = vpop.f32.mrf.mxu0
    %v290 = vadd.f32 0.0, %v289
    %291 = vmatmul.f32.gmra.mxu0 %v73
    %v292 = vpop.f32.mrf.mxu0
    %v293 = vadd.f32 0.0, %v292
    %294 = vmatmul.f32.gmra.mxu0 %v74
    %v295 = vpop.f32.mrf.mxu0
    %v296 = vadd.f32 0.0, %v295
    %297 = vmatmul.f32.gmra.mxu0 %v75
    %v298 = vpop.f32.mrf.mxu0
    %v299 = vadd.f32 0.0, %v298
    %300 = vmatmul.f32.gmra.mxu0 %v76
    %v301 = vpop.f32.mrf.mxu0
    %v302 = vadd.f32 0.0, %v301
    %303 = vmatmul.f32.gmra.mxu0 %v77
    %v304 = vpop.f32.mrf.mxu0
    %v305 = vadd.f32 0.0, %v304
    %306 = vmatmul.f32.gmra.mxu0 %v78
    %v307 = vpop.f32.mrf.mxu0
    %v308 = vadd.f32 0.0, %v307
    %309 = vmatmul.f32.gmra.mxu0 %v79
    %v310 = vpop.f32.mrf.mxu0
    %v311 = vadd.f32 0.0, %v310
    %312 = vmatmul.f32.gmra.mxu0 %v80
    %v313 = vpop.f32.mrf.mxu0
    %v314 = vadd.f32 0.0, %v313
    %315 = vmatmul.f32.gmra.mxu0 %v81
    %v316 = vpop.f32.mrf.mxu0
    %v317 = vadd.f32 0.0, %v316
    %318 = vmatmul.f32.gmra.mxu0 %v82
    %v319 = vpop.f32.mrf.mxu0
    %v320 = vadd.f32 0.0, %v319
    %321 = vmatmul.f32.gmra.mxu0 %v83
    %v322 = vpop.f32.mrf.mxu0
    %v323 = vadd.f32 0.0, %v322
    %324 = vmatmul.f32.gmra.mxu0 %v84
    %v325 = vpop.f32.mrf.mxu0
    %v326 = vadd.f32 0.0, %v325
    %327 = vmatmul.f32.gmra.mxu0 %v85
    %v328 = vpop.f32.mrf.mxu0
    %v329 = vadd.f32 0.0, %v328
    %330 = vmatmul.f32.gmra.mxu0 %v86
    %v331 = vpop.f32.mrf.mxu0
    %v332 = vadd.f32 0.0, %v331
    %333 = vmatmul.f32.gmra.mxu0 %v87
    %v334 = vpop.f32.mrf.mxu0
    %v335 = vadd.f32 0.0, %v334
    %336 = vmatmul.f32.gmra.mxu0 %v88
    %v337 = vpop.f32.mrf.mxu0
    %v338 = vadd.f32 0.0, %v337
    %339 = vmatmul.f32.gmra.mxu0 %v89
    %v340 = vpop.f32.mrf.mxu0
    %v341 = vadd.f32 0.0, %v340
    %342 = vmatmul.f32.gmra.mxu0 %v90
    %v343 = vpop.f32.mrf.mxu0
    %v344 = vadd.f32 0.0, %v343
    %345 = vmatmul.f32.gmra.mxu0 %v91
    %v346 = vpop.f32.mrf.mxu0
    %v347 = vadd.f32 0.0, %v346
    %348 = vmatmul.f32.gmra.mxu0 %v92
    %v349 = vpop.f32.mrf.mxu0
    %v350 = vadd.f32 0.0, %v349
    %351 = vmatmul.f32.gmra.mxu0 %v93
    %v352 = vpop.f32.mrf.mxu0
    %v353 = vadd.f32 0.0, %v352
    %354 = vmatmul.f32.gmra.mxu0 %v94
    %v355 = vpop.f32.mrf.mxu0
    %v356 = vadd.f32 0.0, %v355
    %357 = vmatmul.f32.gmra.mxu0 %v95
    %v358 = vpop.f32.mrf.mxu0
    %v359 = vadd.f32 0.0, %v358
    %360 = vmatmul.f32.gmra.mxu0 %v96
    %v361 = vpop.f32.mrf.mxu0
    %v362 = vadd.f32 0.0, %v361
    %363 = vmatmul.f32.gmra.mxu0 %v97
    %v364 = vpop.f32.mrf.mxu0
    %v365 = vadd.f32 0.0, %v364
    %366 = vmatmul.f32.gmra.mxu0 %v98
    %v367 = vpop.f32.mrf.mxu0
    %v368 = vadd.f32 0.0, %v367
    %369 = vmatmul.f32.gmra.mxu0 %v99
    %v370 = vpop.f32.mrf.mxu0
    %v371 = vadd.f32 0.0, %v370
    %372 = vmatmul.f32.gmra.mxu0 %v100
    %v373 = vpop.f32.mrf.mxu0
    %v374 = vadd.f32 0.0, %v373
    %375 = vmatmul.f32.gmra.mxu0 %v101
    %v376 = vpop.f32.mrf.mxu0
    %v377 = vadd.f32 0.0, %v376
    %378 = vmatmul.f32.gmra.mxu0 %v102
    %v379 = vpop.f32.mrf.mxu0
    %v380 = vadd.f32 0.0, %v379
    %381 = vmatmul.f32.gmra.mxu0 %v103
    %v382 = vpop.f32.mrf.mxu0
    %v383 = vadd.f32 0.0, %v382
    %384 = vmatmul.f32.gmra.mxu0 %v104
    %v385 = vpop.f32.mrf.mxu0
    %v386 = vadd.f32 0.0, %v385
    %387 = vmatmul.f32.gmra.mxu0 %v105
    %v388 = vpop.f32.mrf.mxu0
    %v389 = vadd.f32 0.0, %v388
    %390 = vmatmul.f32.gmra.mxu0 %v106
    %v391 = vpop.f32.mrf.mxu0
    %v392 = vadd.f32 0.0, %v391
    %393 = vmatmul.f32.gmra.mxu0 %v107
    %v394 = vpop.f32.mrf.mxu0
    %v395 = vadd.f32 0.0, %v394
    %396 = vmatmul.f32.gmra.mxu0 %v108
    %v397 = vpop.f32.mrf.mxu0
    %v398 = vadd.f32 0.0, %v397
    %399 = vmatmul.f32.gmra.mxu0 %v109
    %v400 = vpop.f32.mrf.mxu0
    %v401 = vadd.f32 0.0, %v400
    %402 = vmatmul.f32.gmra.mxu0 %v110
    %v403 = vpop.f32.mrf.mxu0
    %v404 = vadd.f32 0.0, %v403
    %405 = vmatmul.f32.gmra.mxu0 %v111
    %v406 = vpop.f32.mrf.mxu0
    %v407 = vadd.f32 0.0, %v406
    %408 = vmatmul.f32.gmra.mxu0 %v112
    %v409 = vpop.f32.mrf.mxu0
    %v410 = vadd.f32 0.0, %v409
    %411 = vmatmul.f32.gmra.mxu0 %v113
    %v412 = vpop.f32.mrf.mxu0
    %v413 = vadd.f32 0.0, %v412
    %414 = vmatmul.f32.gmra.mxu0 %v114
    %v415 = vpop.f32.mrf.mxu0
    %v416 = vadd.f32 0.0, %v415
    %417 = vmatmul.f32.gmra.mxu0 %v115
    %v418 = vpop.f32.mrf.mxu0
    %v419 = vadd.f32 0.0, %v418
    %420 = vmatmul.f32.gmra.mxu0 %v116
    %v421 = vpop.f32.mrf.mxu0
    %v422 = vadd.f32 0.0, %v421
    %423 = vmatmul.f32.gmra.mxu0 %v117
    %v424 = vpop.f32.mrf.mxu0
    %v425 = vadd.f32 0.0, %v424
    %426 = vmatmul.f32.gmra.mxu0 %v118
    %v427 = vpop.f32.mrf.mxu0
    %v428 = vadd.f32 0.0, %v427
    %429 = vmatmul.f32.gmra.mxu0 %v119
    %v430 = vpop.f32.mrf.mxu0
    %v431 = vadd.f32 0.0, %v430
    %432 = vmatmul.f32.gmra.mxu0 %v120
    %v433 = vpop.f32.mrf.mxu0
    %v434 = vadd.f32 0.0, %v433
    %435 = vmatmul.f32.gmra.mxu0 %v121
    %v436 = vpop.f32.mrf.mxu0
    %v437 = vadd.f32 0.0, %v436
    %438 = vmatmul.f32.gmra.mxu0 %v122
    %v439 = vpop.f32.mrf.mxu0
    %v440 = vadd.f32 0.0, %v439
    %441 = vmatmul.f32.gmra.mxu0 %v123
    %v442 = vpop.f32.mrf.mxu0
    %v443 = vadd.f32 0.0, %v442
    %444 = vmatmul.f32.gmra.mxu0 %v124
    %v445 = vpop.f32.mrf.mxu0
    %v446 = vadd.f32 0.0, %v445
    %447 = vmatmul.f32.gmra.mxu0 %v125
    %v448 = vpop.f32.mrf.mxu0
    %v449 = vadd.f32 0.0, %v448
    %450 = vmatmul.f32.gmra.mxu0 %v126
    %v451 = vpop.f32.mrf.mxu0
    %v452 = vadd.f32 0.0, %v451
    %453 = vmatmul.f32.gmra.mxu0 %v127
    %v454 = vpop.f32.mrf.mxu0
    %v455 = vadd.f32 0.0, %v454
    %456 = vmatmul.f32.gmra.mxu0 %v128
    %v457 = vpop.f32.mrf.mxu0
    %v458 = vadd.f32 0.0, %v457
    %459 = vmatmul.f32.gmra.mxu0 %v129
    %v460 = vpop.f32.mrf.mxu0
    %v461 = vadd.f32 0.0, %v460
    %462 = vmatmul.f32.gmra.mxu0 %v130
    %v463 = vpop.f32.mrf.mxu0
    %v464 = vadd.f32 0.0, %v463
    %465 = vmatmul.f32.gmra.mxu0 %v131
    %v466 = vpop.f32.mrf.mxu0
    %v467 = vadd.f32 0.0, %v466
    %468 = vmatmul.f32.gmra.mxu0 %v132
    %v469 = vpop.f32.mrf.mxu0
    %v470 = vadd.f32 0.0, %v469
    %471 = vmatmul.f32.gmra.mxu0 %v133
    %v472 = vpop.f32.mrf.mxu0
    %v473 = vadd.f32 0.0, %v472
    %474 = vmatmul.f32.gmra.mxu0 %v134
    %v475 = vpop.f32.mrf.mxu0
    %v476 = vadd.f32 0.0, %v475
    %477 = vmatmul.f32.gmra.mxu0 %v135
    %v478 = vpop.f32.mrf.mxu0
    %v479 = vadd.f32 0.0, %v478
    %480 = vmatmul.f32.gmra.mxu0 %v136
    %v481 = vpop.f32.mrf.mxu0
    %v482 = vadd.f32 0.0, %v481
    %483 = vmatmul.f32.gmra.mxu0 %v137
    %v484 = vpop.f32.mrf.mxu0
    %v485 = vadd.f32 0.0, %v484
    %486 = vmatmul.f32.gmra.mxu0 %v138
    %v487 = vpop.f32.mrf.mxu0
    %v488 = vadd.f32 0.0, %v487
    %489 = vmatmul.f32.gmra.mxu0 %v139
    %v490 = vpop.f32.mrf.mxu0
    %v491 = vadd.f32 0.0, %v490
    %492 = vmatmul.f32.gmra.mxu0 %v140
    %v493 = vpop.f32.mrf.mxu0
    %v494 = vadd.f32 0.0, %v493
    %495 = vmatmul.f32.gmra.mxu0 %v141
    %v496 = vpop.f32.mrf.mxu0
    %v497 = vadd.f32 0.0, %v496
    %498 = vmatmul.f32.gmra.mxu0 %v142
    %v499 = vpop.f32.mrf.mxu0
    %v500 = vadd.f32 0.0, %v499
    %501 = vmatmul.f32.gmra.mxu0 %v143
    %v502 = vpop.f32.mrf.mxu0
    %v503 = vadd.f32 0.0, %v502
    %504 = vmatmul.f32.gmra.mxu0 %v144
    %v505 = vpop.f32.mrf.mxu0
    %v506 = vadd.f32 0.0, %v505
    %507 = vmatmul.f32.gmra.mxu0 %v145
    %v508 = vpop.f32.mrf.mxu0
    %v509 = vadd.f32 0.0, %v508
    %510 = vmatmul.f32.gmra.mxu0 %v146
    %v511 = vpop.f32.mrf.mxu0
    %v512 = vadd.f32 0.0, %v511
    %513 = vmatmul.f32.gmra.mxu0 %v147
    %v514 = vpop.f32.mrf.mxu0
    %v515 = vadd.f32 0.0, %v514
    %516 = vmatmul.f32.gmra.mxu0 %v148
    %v517 = vpop.f32.mrf.mxu0
    %v518 = vadd.f32 0.0, %v517
    %519 = vmatmul.f32.gmra.mxu0 %v149
    %v520 = vpop.f32.mrf.mxu0
    %v521 = vadd.f32 0.0, %v520
    %522 = vmatmul.f32.gmra.mxu0 %v150
    %v523 = vpop.f32.mrf.mxu0
    %v524 = vadd.f32 0.0, %v523
    %525 = vmatmul.f32.gmra.mxu0 %v151
    %v526 = vpop.f32.mrf.mxu0
    %v527 = vadd.f32 0.0, %v526
    %528 = vmatmul.f32.gmra.mxu0 %v152
    %v529 = vpop.f32.mrf.mxu0
    %v530 = vadd.f32 0.0, %v529
    %531 = vmatmul.f32.gmra.mxu0 %v153
    %v532 = vpop.f32.mrf.mxu0
    %v533 = vadd.f32 0.0, %v532
    %534 = vmatmul.f32.gmra.mxu0 %v154
    %v535 = vpop.f32.mrf.mxu0
    %v536 = vadd.f32 0.0, %v535
    %537 = vmatmul.f32.gmra.mxu0 %v155
    %v538 = vpop.f32.mrf.mxu0
    %v539 = vadd.f32 0.0, %v538
    %540 = vmatmul.f32.gmra.mxu0 %v156
    %v541 = vpop.f32.mrf.mxu0
    %v542 = vadd.f32 0.0, %v541
    %543 = vmatmul.f32.gmra.mxu0 %v157
    %v544 = vpop.f32.mrf.mxu0
    %v545 = vadd.f32 0.0, %v544
    %546 = vmatmul.f32.gmra.mxu0 %v158
    %v547 = vpop.f32.mrf.mxu0
    %v548 = vadd.f32 0.0, %v547
    %549 = vmatmul.f32.gmra.mxu0 %v159
    %v550 = vpop.f32.mrf.mxu0
    %v551 = vadd.f32 0.0, %v550
    %552 = vmatmul.f32.gmra.mxu0 %v160
    %v553 = vpop.f32.mrf.mxu0
    %v554 = vadd.f32 0.0, %v553
    %555 = vmatmul.f32.gmra.mxu0 %v161
    %v556 = vpop.f32.mrf.mxu0
    %v557 = vadd.f32 0.0, %v556
    %558 = vmatmul.f32.gmra.mxu0 %v162
    %v559 = vpop.f32.mrf.mxu0
    %v560 = vadd.f32 0.0, %v559
    %561 = vmatmul.f32.gmra.mxu0 %v163
    %v562 = vpop.f32.mrf.mxu0
    %v563 = vadd.f32 0.0, %v562
    %564 = vmatmul.f32.gmra.mxu0 %v164
    %v565 = vpop.f32.mrf.mxu0
    %v566 = vadd.f32 0.0, %v565
    %567 = vmatmul.f32.gmra.mxu0 %v165
    %v568 = vpop.f32.mrf.mxu0
    %v569 = vadd.f32 0.0, %v568
    %570 = vmatmul.f32.gmra.mxu0 %v166
    %v571 = vpop.f32.mrf.mxu0
    %v572 = vadd.f32 0.0, %v571
    %573 = vmatmul.f32.gmra.mxu0 %v167
    %v574 = vpop.f32.mrf.mxu0
    %v575 = vadd.f32 0.0, %v574
    %576 = vmatmul.f32.gmra.mxu0 %v168
    %v577 = vpop.f32.mrf.mxu0
    %v578 = vadd.f32 0.0, %v577
    %579 = vmatmul.f32.gmra.mxu0 %v169
    %v580 = vpop.f32.mrf.mxu0
    %v581 = vadd.f32 0.0, %v580
    %582 = vmatmul.f32.gmra.mxu0 %v170
    %v583 = vpop.f32.mrf.mxu0
    %v584 = vadd.f32 0.0, %v583
    %585 = vmatmul.f32.gmra.mxu0 %v171
    %v586 = vpop.f32.mrf.mxu0
    %v587 = vadd.f32 0.0, %v586
    %588 = vdwg.mxu0
    %589 = vst [vmem:[#allocation7] sm:$0xff] %v206
    %590 = vst [vmem:[#allocation7 + $0x8] sm:$0xff] %v209
    %591 = vst [vmem:[#allocation7 + $0x10] sm:$0xff] %v212
    %592 = vst [vmem:[#allocation7 + $0x18] sm:$0xff] %v215
    %593 = vst [vmem:[#allocation7 + $0x20] sm:$0xff] %v218
    %594 = vst [vmem:[#allocation7 + $0x28] sm:$0xff] %v221
    %595 = vst [vmem:[#allocation7 + $0x30] sm:$0xff] %v224
    %596 = vst [vmem:[#allocation7 + $0x38] sm:$0xff] %v227
    %597 = vst [vmem:[#allocation7 + $0x40] sm:$0xff] %v230
    %598 = vst [vmem:[#allocation7 + $0x48] sm:$0xff] %v233
    %599 = vst [vmem:[#allocation7 + $0x50] sm:$0xff] %v236
    %600 = vst [vmem:[#allocation7 + $0x58] sm:$0xff] %v239
    %601 = vst [vmem:[#allocation7 + $0x60] sm:$0xff] %v242
    %602 = vst [vmem:[#allocation7 + $0x68] sm:$0xff] %v245
    %603 = vst [vmem:[#allocation7 + $0x70] sm:$0xff] %v248
    %604 = vst [vmem:[#allocation7 + $0x78] sm:$0xff] %v251
    %605 = vst [vmem:[#allocation7 + $0x80] sm:$0xff] %v254
    %606 = vst [vmem:[#allocation7 + $0x88] sm:$0xff] %v257
    %607 = vst [vmem:[#allocation7 + $0x90] sm:$0xff] %v260
    %608 = vst [vmem:[#allocation7 + $0x98] sm:$0xff] %v263
    %609 = vst [vmem:[#allocation7 + $0xa0] sm:$0xff] %v266
    %610 = vst [vmem:[#allocation7 + $0xa8] sm:$0xff] %v269
    %611 = vst [vmem:[#allocation7 + $0xb0] sm:$0xff] %v272
    %612 = vst [vmem:[#allocation7 + $0xb8] sm:$0xff] %v275
    %613 = vst [vmem:[#allocation7 + $0xc0] sm:$0xff] %v278
    %614 = vst [vmem:[#allocation7 + $0xc8] sm:$0xff] %v281
    %615 = vst [vmem:[#allocation7 + $0xd0] sm:$0xff] %v284
    %616 = vst [vmem:[#allocation7 + $0xd8] sm:$0xff] %v287
    %617 = vst [vmem:[#allocation7 + $0xe0] sm:$0xff] %v290
    %618 = vst [vmem:[#allocation7 + $0xe8] sm:$0xff] %v293
    %619 = vst [vmem:[#allocation7 + $0xf0] sm:$0xff] %v296
    %620 = vst [vmem:[#allocation7 + $0xf8] sm:$0xff] %v299
    %621 = vst [vmem:[#allocation7 + $0x100] sm:$0xff] %v302
    %622 = vst [vmem:[#allocation7 + $0x108] sm:$0xff] %v305
    %623 = vst [vmem:[#allocation7 + $0x110] sm:$0xff] %v308
    %624 = vst [vmem:[#allocation7 + $0x118] sm:$0xff] %v311
    %625 = vst [vmem:[#allocation7 + $0x120] sm:$0xff] %v314
    %626 = vst [vmem:[#allocation7 + $0x128] sm:$0xff] %v317
    %627 = vst [vmem:[#allocation7 + $0x130] sm:$0xff] %v320
    %628 = vst [vmem:[#allocation7 + $0x138] sm:$0xff] %v323
    %629 = vst [vmem:[#allocation7 + $0x140] sm:$0xff] %v326
    %630 = vst [vmem:[#allocation7 + $0x148] sm:$0xff] %v329
    %631 = vst [vmem:[#allocation7 + $0x150] sm:$0xff] %v332
    %632 = vst [vmem:[#allocation7 + $0x158] sm:$0xff] %v335
    %633 = vst [vmem:[#allocation7 + $0x160] sm:$0xff] %v338
    %634 = vst [vmem:[#allocation7 + $0x168] sm:$0xff] %v341
    %635 = vst [vmem:[#allocation7 + $0x170] sm:$0xff] %v344
    %636 = vst [vmem:[#allocation7 + $0x178] sm:$0xff] %v347
    %637 = vst [vmem:[#allocation7 + $0x180] sm:$0xff] %v350
    %638 = vst [vmem:[#allocation7 + $0x188] sm:$0xff] %v353
    %639 = vst [vmem:[#allocation7 + $0x190] sm:$0xff] %v356
    %640 = vst [vmem:[#allocation7 + $0x198] sm:$0xff] %v359
    %641 = vst [vmem:[#allocation7 + $0x1a0] sm:$0xff] %v362
    %642 = vst [vmem:[#allocation7 + $0x1a8] sm:$0xff] %v365
    %643 = vst [vmem:[#allocation7 + $0x1b0] sm:$0xff] %v368
    %644 = vst [vmem:[#allocation7 + $0x1b8] sm:$0xff] %v371
    %645 = vst [vmem:[#allocation7 + $0x1c0] sm:$0xff] %v374
    %646 = vst [vmem:[#allocation7 + $0x1c8] sm:$0xff] %v377
    %647 = vst [vmem:[#allocation7 + $0x1d0] sm:$0xff] %v380
    %648 = vst [vmem:[#allocation7 + $0x1d8] sm:$0xff] %v383
    %649 = vst [vmem:[#allocation7 + $0x1e0] sm:$0xff] %v386
    %650 = vst [vmem:[#allocation7 + $0x1e8] sm:$0xff] %v389
    %651 = vst [vmem:[#allocation7 + $0x1f0] sm:$0xff] %v392
    %652 = vst [vmem:[#allocation7 + $0x1f8] sm:$0xff] %v395
    %653 = vst [vmem:[#allocation7 + $0x200] sm:$0xff] %v398
    %654 = vst [vmem:[#allocation7 + $0x208] sm:$0xff] %v401
    %655 = vst [vmem:[#allocation7 + $0x210] sm:$0xff] %v404
    %656 = vst [vmem:[#allocation7 + $0x218] sm:$0xff] %v407
    %657 = vst [vmem:[#allocation7 + $0x220] sm:$0xff] %v410
    %658 = vst [vmem:[#allocation7 + $0x228] sm:$0xff] %v413
    %659 = vst [vmem:[#allocation7 + $0x230] sm:$0xff] %v416
    %660 = vst [vmem:[#allocation7 + $0x238] sm:$0xff] %v419
    %661 = vst [vmem:[#allocation7 + $0x240] sm:$0xff] %v422
    %662 = vst [vmem:[#allocation7 + $0x248] sm:$0xff] %v425
    %663 = vst [vmem:[#allocation7 + $0x250] sm:$0xff] %v428
    %664 = vst [vmem:[#allocation7 + $0x258] sm:$0xff] %v431
    %665 = vst [vmem:[#allocation7 + $0x260] sm:$0xff] %v434
    %666 = vst [vmem:[#allocation7 + $0x268] sm:$0xff] %v437
    %667 = vst [vmem:[#allocation7 + $0x270] sm:$0xff] %v440
    %668 = vst [vmem:[#allocation7 + $0x278] sm:$0xff] %v443
    %669 = vst [vmem:[#allocation7 + $0x280] sm:$0xff] %v446
    %670 = vst [vmem:[#allocation7 + $0x288] sm:$0xff] %v449
    %671 = vst [vmem:[#allocation7 + $0x290] sm:$0xff] %v452
    %672 = vst [vmem:[#allocation7 + $0x298] sm:$0xff] %v455
    %673 = vst [vmem:[#allocation7 + $0x2a0] sm:$0xff] %v458
    %674 = vst [vmem:[#allocation7 + $0x2a8] sm:$0xff] %v461
    %675 = vst [vmem:[#allocation7 + $0x2b0] sm:$0xff] %v464
    %676 = vst [vmem:[#allocation7 + $0x2b8] sm:$0xff] %v467
    %677 = vst [vmem:[#allocation7 + $0x2c0] sm:$0xff] %v470
    %678 = vst [vmem:[#allocation7 + $0x2c8] sm:$0xff] %v473
    %679 = vst [vmem:[#allocation7 + $0x2d0] sm:$0xff] %v476
    %680 = vst [vmem:[#allocation7 + $0x2d8] sm:$0xff] %v479
    %681 = vst [vmem:[#allocation7 + $0x2e0] sm:$0xff] %v482
    %682 = vst [vmem:[#allocation7 + $0x2e8] sm:$0xff] %v485
    %683 = vst [vmem:[#allocation7 + $0x2f0] sm:$0xff] %v488
    %684 = vst [vmem:[#allocation7 + $0x2f8] sm:$0xff] %v491
    %685 = vst [vmem:[#allocation7 + $0x300] sm:$0xff] %v494
    %686 = vst [vmem:[#allocation7 + $0x308] sm:$0xff] %v497
    %687 = vst [vmem:[#allocation7 + $0x310] sm:$0xff] %v500
    %688 = vst [vmem:[#allocation7 + $0x318] sm:$0xff] %v503
    %689 = vst [vmem:[#allocation7 + $0x320] sm:$0xff] %v506
    %690 = vst [vmem:[#allocation7 + $0x328] sm:$0xff] %v509
    %691 = vst [vmem:[#allocation7 + $0x330] sm:$0xff] %v512
    %692 = vst [vmem:[#allocation7 + $0x338] sm:$0xff] %v515
    %693 = vst [vmem:[#allocation7 + $0x340] sm:$0xff] %v518
    %694 = vst [vmem:[#allocation7 + $0x348] sm:$0xff] %v521
    %695 = vst [vmem:[#allocation7 + $0x350] sm:$0xff] %v524
    %696 = vst [vmem:[#allocation7 + $0x358] sm:$0xff] %v527
    %697 = vst [vmem:[#allocation7 + $0x360] sm:$0xff] %v530
    %698 = vst [vmem:[#allocation7 + $0x368] sm:$0xff] %v533
    %699 = vst [vmem:[#allocation7 + $0x370] sm:$0xff] %v536
    %700 = vst [vmem:[#allocation7 + $0x378] sm:$0xff] %v539
    %701 = vst [vmem:[#allocation7 + $0x380] sm:$0xff] %v542
    %702 = vst [vmem:[#allocation7 + $0x388] sm:$0xff] %v545
    %703 = vst [vmem:[#allocation7 + $0x390] sm:$0xff] %v548
    %704 = vst [vmem:[#allocation7 + $0x398] sm:$0xff] %v551
    %705 = vst [vmem:[#allocation7 + $0x3a0] sm:$0xff] %v554
    %706 = vst [vmem:[#allocation7 + $0x3a8] sm:$0xff] %v557
    %707 = vst [vmem:[#allocation7 + $0x3b0] sm:$0xff] %v560
    %708 = vst [vmem:[#allocation7 + $0x3b8] sm:$0xff] %v563
    %709 = vst [vmem:[#allocation7 + $0x3c0] sm:$0xff] %v566
    %710 = vst [vmem:[#allocation7 + $0x3c8] sm:$0xff] %v569
    %711 = vst [vmem:[#allocation7 + $0x3d0] sm:$0xff] %v572
    %712 = vst [vmem:[#allocation7 + $0x3d8] sm:$0xff] %v575
    %713 = vst [vmem:[#allocation7 + $0x3e0] sm:$0xff] %v578
    %714 = vst [vmem:[#allocation7 + $0x3e8] sm:$0xff] %v581
    %715 = vst [vmem:[#allocation7 + $0x3f0] sm:$0xff] %v584
    %716 = vst [vmem:[#allocation7 + $0x3f8] sm:$0xff] %v587
    // Predicated region
    $region18: #{tpu_custom_call.1} parent=1 // pred_check
      _
    $region19: #{tpu_custom_call.1} parent=1 // pred_check_branch
      %718 = sbr.rel (0) target = $region21
    $region20: #{tpu_custom_call.1} parent=1 // pred_region
      %720 = vsyncadd [#allocation4], 0
      %s721 = sshll.u32 [#allocation7], 4
      %s722 = int_to_ptr.vmem [resolvable:$true] %s721
      %s723 = sshll.u32 %s2, 4
      %s724 = int_to_ptr.hbm [resolvable:$true] %s723
      %729 = dma.vmem_to_hbm [thread:$0]  %s722, 16384, %s724, [#allocation4], 128, 128, 8
    $region21: #{tpu_custom_call.1} parent=1 // pred_fallthru
      _
    // Predicated region
    $region22: #{tpu_custom_call.1} parent=1 // pred_check
      _
    $region23: #{tpu_custom_call.1} parent=1 // pred_check_branch
      %731 = sbr.rel (0) target = $region25
    $region24: #{tpu_custom_call.1} parent=1 // pred_region
      %733 = dma.done [#allocation4], 16384
    $region25: #{tpu_custom_call.1} parent=1 // pred_fallthru
      _
    %734 = vsyncpa [#allocation3], 1
    %735 = vsyncpa [#allocation6], 1
    %736 = vsyncpa [#allocation4], 1

// kernel: tpu_custom_call.1
$region0: #{tpu_custom_call.1}
  #allocation0 [shape = 'u32[]', space=smem, size = 0x4, offset = 0x4, fixed_abs, tag = 'smem constant byte address 0x4 - core index']
  #allocation1 [shape = 'u32[72,128]{1,0:T(1,128)}', space=vmem, size = 0x9000, scoped, tag = 'internal scratch']
  %s0 = inlined_call_operand.hbm [shape: f32[1024,128], index: 0, kind: input, shape index: {}]
  %s1 = inlined_call_operand.hbm [shape: f32[128,128], index: 1, kind: input, shape index: {}]
  %s2 = inlined_call_operand.hbm [shape: f32[1024,128], index: 2, kind: output, shape index: {}]
  %s3 = sld [smem:[#allocation0]]
  $region26: #{tpu_custom_call.1} parent=0
    _
  %s5 = ssub.s32 1, %s3
  %s6 = scalar_select 0, %s5, %s3
  $region1: #{tpu_custom_call.1} parent=0
    #allocation2 [shape = 'u8[524288]{0}', space=vmem, size = 0x80000, scoped, tag = 'input window, operand 0, single buffered']
    #allocation3 [shape = 's32[1]{0}', space=sflag, size = 0x4, scoped, tag = 'scoped memory for tpu_custom_call.1']
    #allocation4 [shape = 's32[1]{0}', space=sflag, size = 0x4, scoped, tag = 'scoped memory for tpu_custom_call.1']
    #allocation5 [shape = 'u8[65536]{0}', space=vmem, size = 0x10000, scoped, tag = 'input window, operand 1, single buffered']
    #allocation6 [shape = 's32[1]{0}', space=sflag, size = 0x4, scoped, tag = 'scoped memory for tpu_custom_call.1']
    #allocation7 [shape = 'u8[524288]{0}', space=vmem, size = 0x80000, scoped, tag = 'output window, operand 0, single buffered']
    %7 = vsyncpa [#allocation3], 0
    %8 = vsyncpa [#allocation6], 0
    %9 = vsyncpa [#allocation4], 0
    // Predicated region
    $region2: #{tpu_custom_call.1} parent=1 // pred_check
      _
    $region3: #{tpu_custom_call.1} parent=1 // pred_check_branch
      %11 = sbr.rel (0) target = $region5
    $region4: #{tpu_custom_call.1} parent=1 // pred_region
      %13 = vsyncadd [#allocation3], 0
      %s14 = sshll.u32 %s0, 4
      %s15 = int_to_ptr.hbm [resolvable:$true] %s14
      %s16 = sshll.u32 [#allocation2], 4
      %s17 = int_to_ptr.vmem [resolvable:$true] %s16
      %22 = dma.hbm_to_vmem [thread:$0]  %s15, 16384, %s17, [#allocation3], 128, 128, 8
    $region5: #{tpu_custom_call.1} parent=1 // pred_fallthru
      _
    // Predicated region
    $region6: #{tpu_custom_call.1} parent=1 // pred_check
      _
    $region7: #{tpu_custom_call.1} parent=1 // pred_check_branch
      %24 = sbr.rel (0) target = $region9
    $region8: #{tpu_custom_call.1} parent=1 // pred_region
      %26 = vsyncadd [#allocation6], 0
      %s27 = sshll.u32 %s1, 4
      %s28 = int_to_ptr.hbm [resolvable:$true] %s27
      %s29 = sshll.u32 [#allocation5], 4
      %s30 = int_to_ptr.vmem [resolvable:$true] %s29
      %35 = dma.hbm_to_vmem [thread:$0]  %s28, 2048, %s30, [#allocation6], 128, 128, 8
    $region9: #{tpu_custom_call.1} parent=1 // pred_fallthru
      _
    // Predicated region
    $region10: #{tpu_custom_call.1} parent=1 // pred_check
      _
    $region11: #{tpu_custom_call.1} parent=1 // pred_check_branch
      %37 = sbr.rel (0) target = $region13
    $region12: #{tpu_custom_call.1} parent=1 // pred_region
      %39 = dma.done [#allocation3], 16384
    $region13: #{tpu_custom_call.1} parent=1 // pred_fallthru
      _
    // Predicated region
    $region14: #{tpu_custom_call.1} parent=1 // pred_check
      _
    $region15: #{tpu_custom_call.1} parent=1 // pred_check_branch
      %41 = sbr.rel (0) target = $region17
    $region16: #{tpu_custom_call.1} parent=1 // pred_region
      %43 = dma.done [#allocation6], 2048
    $region17: #{tpu_custom_call.1} parent=1 // pred_fallthru
      _
    %v44 = vld [vmem:[#allocation2] sm:$0xff]
    %v45 = vld [vmem:[#allocation2 + $0x8] sm:$0xff]
    %v46 = vld [vmem:[#allocation2 + $0x10] sm:$0xff]
    %v47 = vld [vmem:[#allocation2 + $0x18] sm:$0xff]
    %v48 = vld [vmem:[#allocation2 + $0x20] sm:$0xff]
    %v49 = vld [vmem:[#allocation2 + $0x28] sm:$0xff]
    %v50 = vld [vmem:[#allocation2 + $0x30] sm:$0xff]
    %v51 = vld [vmem:[#allocation2 + $0x38] sm:$0xff]
    %v52 = vld [vmem:[#allocation2 + $0x40] sm:$0xff]
    %v53 = vld [vmem:[#allocation2 + $0x48] sm:$0xff]
    %v54 = vld [vmem:[#allocation2 + $0x50] sm:$0xff]
    %v55 = vld [vmem:[#allocation2 + $0x58] sm:$0xff]
    %v56 = vld [vmem:[#allocation2 + $0x60] sm:$0xff]
    %v57 = vld [vmem:[#allocation2 + $0x68] sm:$0xff]
    %v58 = vld [vmem:[#allocation2 + $0x70] sm:$0xff]
    %v59 = vld [vmem:[#allocation2 + $0x78] sm:$0xff]
    %v60 = vld [vmem:[#allocation2 + $0x80] sm:$0xff]
    %v61 = vld [vmem:[#allocation2 + $0x88] sm:$0xff]
    %v62 = vld [vmem:[#allocation2 + $0x90] sm:$0xff]
    %v63 = vld [vmem:[#allocation2 + $0x98] sm:$0xff]
    %v64 = vld [vmem:[#allocation2 + $0xa0] sm:$0xff]
    %v65 = vld [vmem:[#allocation2 + $0xa8] sm:$0xff]
    %v66 = vld [vmem:[#allocation2 + $0xb0] sm:$0xff]
    %v67 = vld [vmem:[#allocation2 + $0xb8] sm:$0xff]
    %v68 = vld [vmem:[#allocation2 + $0xc0] sm:$0xff]
    %v69 = vld [vmem:[#allocation2 + $0xc8] sm:$0xff]
    %v70 = vld [vmem:[#allocation2 + $0xd0] sm:$0xff]
    %v71 = vld [vmem:[#allocation2 + $0xd8] sm:$0xff]
    %v72 = vld [vmem:[#allocation2 + $0xe0] sm:$0xff]
    %v73 = vld [vmem:[#allocation2 + $0xe8] sm:$0xff]
    %v74 = vld [vmem:[#allocation2 + $0xf0] sm:$0xff]
    %v75 = vld [vmem:[#allocation2 + $0xf8] sm:$0xff]
    %v76 = vld [vmem:[#allocation2 + $0x100] sm:$0xff]
    %v77 = vld [vmem:[#allocation2 + $0x108] sm:$0xff]
    %v78 = vld [vmem:[#allocation2 + $0x110] sm:$0xff]
    %v79 = vld [vmem:[#allocation2 + $0x118] sm:$0xff]
    %v80 = vld [vmem:[#allocation2 + $0x120] sm:$0xff]
    %v81 = vld [vmem:[#allocation2 + $0x128] sm:$0xff]
    %v82 = vld [vmem:[#allocation2 + $0x130] sm:$0xff]
    %v83 = vld [vmem:[#allocation2 + $0x138] sm:$0xff]
    %v84 = vld [vmem:[#allocation2 + $0x140] sm:$0xff]
    %v85 = vld [vmem:[#allocation2 + $0x148] sm:$0xff]
    %v86 = vld [vmem:[#allocation2 + $0x150] sm:$0xff]
    %v87 = vld [vmem:[#allocation2 + $0x158] sm:$0xff]
    %v88 = vld [vmem:[#allocation2 + $0x160] sm:$0xff]
    %v89 = vld [vmem:[#allocation2 + $0x168] sm:$0xff]
    %v90 = vld [vmem:[#allocation2 + $0x170] sm:$0xff]
    %v91 = vld [vmem:[#allocation2 + $0x178] sm:$0xff]
    %v92 = vld [vmem:[#allocation2 + $0x180] sm:$0xff]
    %v93 = vld [vmem:[#allocation2 + $0x188] sm:$0xff]
    %v94 = vld [vmem:[#allocation2 + $0x190] sm:$0xff]
    %v95 = vld [vmem:[#allocation2 + $0x198] sm:$0xff]
    %v96 = vld [vmem:[#allocation2 + $0x1a0] sm:$0xff]
    %v97 = vld [vmem:[#allocation2 + $0x1a8] sm:$0xff]
    %v98 = vld [vmem:[#allocation2 + $0x1b0] sm:$0xff]
    %v99 = vld [vmem:[#allocation2 + $0x1b8] sm:$0xff]
    %v100 = vld [vmem:[#allocation2 + $0x1c0] sm:$0xff]
    %v101 = vld [vmem:[#allocation2 + $0x1c8] sm:$0xff]
    %v102 = vld [vmem:[#allocation2 + $0x1d0] sm:$0xff]
    %v103 = vld [vmem:[#allocation2 + $0x1d8] sm:$0xff]
    %v104 = vld [vmem:[#allocation2 + $0x1e0] sm:$0xff]
    %v105 = vld [vmem:[#allocation2 + $0x1e8] sm:$0xff]
    %v106 = vld [vmem:[#allocation2 + $0x1f0] sm:$0xff]
    %v107 = vld [vmem:[#allocation2 + $0x1f8] sm:$0xff]
    %v108 = vld [vmem:[#allocation2 + $0x200] sm:$0xff]
    %v109 = vld [vmem:[#allocation2 + $0x208] sm:$0xff]
    %v110 = vld [vmem:[#allocation2 + $0x210] sm:$0xff]
    %v111 = vld [vmem:[#allocation2 + $0x218] sm:$0xff]
    %v112 = vld [vmem:[#allocation2 + $0x220] sm:$0xff]
    %v113 = vld [vmem:[#allocation2 + $0x228] sm:$0xff]
    %v114 = vld [vmem:[#allocation2 + $0x230] sm:$0xff]
    %v115 = vld [vmem:[#allocation2 + $0x238] sm:$0xff]
    %v116 = vld [vmem:[#allocation2 + $0x240] sm:$0xff]
    %v117 = vld [vmem:[#allocation2 + $0x248] sm:$0xff]
    %v118 = vld [vmem:[#allocation2 + $0x250] sm:$0xff]
    %v119 = vld [vmem:[#allocation2 + $0x258] sm:$0xff]
    %v120 = vld [vmem:[#allocation2 + $0x260] sm:$0xff]
    %v121 = vld [vmem:[#allocation2 + $0x268] sm:$0xff]
    %v122 = vld [vmem:[#allocation2 + $0x270] sm:$0xff]
    %v123 = vld [vmem:[#allocation2 + $0x278] sm:$0xff]
    %v124 = vld [vmem:[#allocation2 + $0x280] sm:$0xff]
    %v125 = vld [vmem:[#allocation2 + $0x288] sm:$0xff]
    %v126 = vld [vmem:[#allocation2 + $0x290] sm:$0xff]
    %v127 = vld [vmem:[#allocation2 + $0x298] sm:$0xff]
    %v128 = vld [vmem:[#allocation2 + $0x2a0] sm:$0xff]
    %v129 = vld [vmem:[#allocation2 + $0x2a8] sm:$0xff]
    %v130 = vld [vmem:[#allocation2 + $0x2b0] sm:$0xff]
    %v131 = vld [vmem:[#allocation2 + $0x2b8] sm:$0xff]
    %v132 = vld [vmem:[#allocation2 + $0x2c0] sm:$0xff]
    %v133 = vld [vmem:[#allocation2 + $0x2c8] sm:$0xff]
    %v134 = vld [vmem:[#allocation2 + $0x2d0] sm:$0xff]
    %v135 = vld [vmem:[#allocation2 + $0x2d8] sm:$0xff]
    %v136 = vld [vmem:[#allocation2 + $0x2e0] sm:$0xff]
    %v137 = vld [vmem:[#allocation2 + $0x2e8] sm:$0xff]
    %v138 = vld [vmem:[#allocation2 + $0x2f0] sm:$0xff]
    %v139 = vld [vmem:[#allocation2 + $0x2f8] sm:$0xff]
    %v140 = vld [vmem:[#allocation2 + $0x300] sm:$0xff]
    %v141 = vld [vmem:[#allocation2 + $0x308] sm:$0xff]
    %v142 = vld [vmem:[#allocation2 + $0x310] sm:$0xff]
    %v143 = vld [vmem:[#allocation2 + $0x318] sm:$0xff]
    %v144 = vld [vmem:[#allocation2 + $0x320] sm:$0xff]
    %v145 = vld [vmem:[#allocation2 + $0x328] sm:$0xff]
    %v146 = vld [vmem:[#allocation2 + $0x330] sm:$0xff]
    %v147 = vld [vmem:[#allocation2 + $0x338] sm:$0xff]
    %v148 = vld [vmem:[#allocation2 + $0x340] sm:$0xff]
    %v149 = vld [vmem:[#allocation2 + $0x348] sm:$0xff]
    %v150 = vld [vmem:[#allocation2 + $0x350] sm:$0xff]
    %v151 = vld [vmem:[#allocation2 + $0x358] sm:$0xff]
    %v152 = vld [vmem:[#allocation2 + $0x360] sm:$0xff]
    %v153 = vld [vmem:[#allocation2 + $0x368] sm:$0xff]
    %v154 = vld [vmem:[#allocation2 + $0x370] sm:$0xff]
    %v155 = vld [vmem:[#allocation2 + $0x378] sm:$0xff]
    %v156 = vld [vmem:[#allocation2 + $0x380] sm:$0xff]
    %v157 = vld [vmem:[#allocation2 + $0x388] sm:$0xff]
    %v158 = vld [vmem:[#allocation2 + $0x390] sm:$0xff]
    %v159 = vld [vmem:[#allocation2 + $0x398] sm:$0xff]
    %v160 = vld [vmem:[#allocation2 + $0x3a0] sm:$0xff]
    %v161 = vld [vmem:[#allocation2 + $0x3a8] sm:$0xff]
    %v162 = vld [vmem:[#allocation2 + $0x3b0] sm:$0xff]
    %v163 = vld [vmem:[#allocation2 + $0x3b8] sm:$0xff]
    %v164 = vld [vmem:[#allocation2 + $0x3c0] sm:$0xff]
    %v165 = vld [vmem:[#allocation2 + $0x3c8] sm:$0xff]
    %v166 = vld [vmem:[#allocation2 + $0x3d0] sm:$0xff]
    %v167 = vld [vmem:[#allocation2 + $0x3d8] sm:$0xff]
    %v168 = vld [vmem:[#allocation2 + $0x3e0] sm:$0xff]
    %v169 = vld [vmem:[#allocation2 + $0x3e8] sm:$0xff]
    %v170 = vld [vmem:[#allocation2 + $0x3f0] sm:$0xff]
    %v171 = vld [vmem:[#allocation2 + $0x3f8] sm:$0xff]
    %v172 = vld [vmem:[#allocation5] sm:$0xff]
    %v173 = vld [vmem:[#allocation5 + $0x8] sm:$0xff]
    %v174 = vld [vmem:[#allocation5 + $0x10] sm:$0xff]
    %v175 = vld [vmem:[#allocation5 + $0x18] sm:$0xff]
    %v176 = vld [vmem:[#allocation5 + $0x20] sm:$0xff]
    %v177 = vld [vmem:[#allocation5 + $0x28] sm:$0xff]
    %v178 = vld [vmem:[#allocation5 + $0x30] sm:$0xff]
    %v179 = vld [vmem:[#allocation5 + $0x38] sm:$0xff]
    %v180 = vld [vmem:[#allocation5 + $0x40] sm:$0xff]
    %v181 = vld [vmem:[#allocation5 + $0x48] sm:$0xff]
    %v182 = vld [vmem:[#allocation5 + $0x50] sm:$0xff]
    %v183 = vld [vmem:[#allocation5 + $0x58] sm:$0xff]
    %v184 = vld [vmem:[#allocation5 + $0x60] sm:$0xff]
    %v185 = vld [vmem:[#allocation5 + $0x68] sm:$0xff]
    %v186 = vld [vmem:[#allocation5 + $0x70] sm:$0xff]
    %v187 = vld [vmem:[#allocation5 + $0x78] sm:$0xff]
    %188 = vmatpush.msra.mxu0 %v187
    %189 = vmatpush.msra.mxu0 %v186
    %190 = vmatpush.msra.mxu0 %v185
    %191 = vmatpush.msra.mxu0 %v184
    %192 = vmatpush.msra.mxu0 %v183
    %193 = vmatpush.msra.mxu0 %v182
    %194 = vmatpush.msra.mxu0 %v181
    %195 = vmatpush.msra.mxu0 %v180
    %196 = vmatpush.msra.mxu0 %v179
    %197 = vmatpush.msra.mxu0 %v178
    %198 = vmatpush.msra.mxu0 %v177
    %199 = vmatpush.msra.mxu0 %v176
    %200 = vmatpush.msra.mxu0 %v175
    %201 = vmatpush.msra.mxu0 %v174
    %202 = vmatpush.msra.mxu0 %v173
    %203 = vmatpush.msra.mxu0 %v172
    %204 = vmatmul.f32.gmra.mxu0 %v44
    %v205 = vpop.f32.mrf.mxu0
    %v206 = vadd.f32 0.0, %v205
    %207 = vmatmul.f32.gmra.mxu0 %v45
    %v208 = vpop.f32.mrf.mxu0
    %v209 = vadd.f32 0.0, %v208
    %210 = vmatmul.f32.gmra.mxu0 %v46
    %v211 = vpop.f32.mrf.mxu0
    %v212 = vadd.f32 0.0, %v211
    %213 = vmatmul.f32.gmra.mxu0 %v47
    %v214 = vpop.f32.mrf.mxu0
    %v215 = vadd.f32 0.0, %v214
    %216 = vmatmul.f32.gmra.mxu0 %v48
    %v217 = vpop.f32.mrf.mxu0
    %v218 = vadd.f32 0.0, %v217
    %219 = vmatmul.f32.gmra.mxu0 %v49
    %v220 = vpop.f32.mrf.mxu0
    %v221 = vadd.f32 0.0, %v220
    %222 = vmatmul.f32.gmra.mxu0 %v50
    %v223 = vpop.f32.mrf.mxu0
    %v224 = vadd.f32 0.0, %v223
    %225 = vmatmul.f32.gmra.mxu0 %v51
    %v226 = vpop.f32.mrf.mxu0
    %v227 = vadd.f32 0.0, %v226
    %228 = vmatmul.f32.gmra.mxu0 %v52
    %v229 = vpop.f32.mrf.mxu0
    %v230 = vadd.f32 0.0, %v229
    %231 = vmatmul.f32.gmra.mxu0 %v53
    %v232 = vpop.f32.mrf.mxu0
    %v233 = vadd.f32 0.0, %v232
    %234 = vmatmul.f32.gmra.mxu0 %v54
    %v235 = vpop.f32.mrf.mxu0
    %v236 = vadd.f32 0.0, %v235
    %237 = vmatmul.f32.gmra.mxu0 %v55
    %v238 = vpop.f32.mrf.mxu0
    %v239 = vadd.f32 0.0, %v238
    %240 = vmatmul.f32.gmra.mxu0 %v56
    %v241 = vpop.f32.mrf.mxu0
    %v242 = vadd.f32 0.0, %v241
    %243 = vmatmul.f32.gmra.mxu0 %v57
    %v244 = vpop.f32.mrf.mxu0
    %v245 = vadd.f32 0.0, %v244
    %246 = vmatmul.f32.gmra.mxu0 %v58
    %v247 = vpop.f32.mrf.mxu0
    %v248 = vadd.f32 0.0, %v247
    %249 = vmatmul.f32.gmra.mxu0 %v59
    %v250 = vpop.f32.mrf.mxu0
    %v251 = vadd.f32 0.0, %v250
    %252 = vmatmul.f32.gmra.mxu0 %v60
    %v253 = vpop.f32.mrf.mxu0
    %v254 = vadd.f32 0.0, %v253
    %255 = vmatmul.f32.gmra.mxu0 %v61
    %v256 = vpop.f32.mrf.mxu0
    %v257 = vadd.f32 0.0, %v256
    %258 = vmatmul.f32.gmra.mxu0 %v62
    %v259 = vpop.f32.mrf.mxu0
    %v260 = vadd.f32 0.0, %v259
    %261 = vmatmul.f32.gmra.mxu0 %v63
    %v262 = vpop.f32.mrf.mxu0
    %v263 = vadd.f32 0.0, %v262
    %264 = vmatmul.f32.gmra.mxu0 %v64
    %v265 = vpop.f32.mrf.mxu0
    %v266 = vadd.f32 0.0, %v265
    %267 = vmatmul.f32.gmra.mxu0 %v65
    %v268 = vpop.f32.mrf.mxu0
    %v269 = vadd.f32 0.0, %v268
    %270 = vmatmul.f32.gmra.mxu0 %v66
    %v271 = vpop.f32.mrf.mxu0
    %v272 = vadd.f32 0.0, %v271
    %273 = vmatmul.f32.gmra.mxu0 %v67
    %v274 = vpop.f32.mrf.mxu0
    %v275 = vadd.f32 0.0, %v274
    %276 = vmatmul.f32.gmra.mxu0 %v68
    %v277 = vpop.f32.mrf.mxu0
    %v278 = vadd.f32 0.0, %v277
    %279 = vmatmul.f32.gmra.mxu0 %v69
    %v280 = vpop.f32.mrf.mxu0
    %v281 = vadd.f32 0.0, %v280
    %282 = vmatmul.f32.gmra.mxu0 %v70
    %v283 = vpop.f32.mrf.mxu0
    %v284 = vadd.f32 0.0, %v283
    %285 = vmatmul.f32.gmra.mxu0 %v71
    %v286 = vpop.f32.mrf.mxu0
    %v287 = vadd.f32 0.0, %v286
    %288 = vmatmul.f32.gmra.mxu0 %v72
    %v289 = vpop.f32.mrf.mxu0
    %v290 = vadd.f32 0.0, %v289
    %291 = vmatmul.f32.gmra.mxu0 %v73
    %v292 = vpop.f32.mrf.mxu0
    %v293 = vadd.f32 0.0, %v292
    %294 = vmatmul.f32.gmra.mxu0 %v74
    %v295 = vpop.f32.mrf.mxu0
    %v296 = vadd.f32 0.0, %v295
    %297 = vmatmul.f32.gmra.mxu0 %v75
    %v298 = vpop.f32.mrf.mxu0
    %v299 = vadd.f32 0.0, %v298
    %300 = vmatmul.f32.gmra.mxu0 %v76
    %v301 = vpop.f32.mrf.mxu0
    %v302 = vadd.f32 0.0, %v301
    %303 = vmatmul.f32.gmra.mxu0 %v77
    %v304 = vpop.f32.mrf.mxu0
    %v305 = vadd.f32 0.0, %v304
    %306 = vmatmul.f32.gmra.mxu0 %v78
    %v307 = vpop.f32.mrf.mxu0
    %v308 = vadd.f32 0.0, %v307
    %309 = vmatmul.f32.gmra.mxu0 %v79
    %v310 = vpop.f32.mrf.mxu0
    %v311 = vadd.f32 0.0, %v310
    %312 = vmatmul.f32.gmra.mxu0 %v80
    %v313 = vpop.f32.mrf.mxu0
    %v314 = vadd.f32 0.0, %v313
    %315 = vmatmul.f32.gmra.mxu0 %v81
    %v316 = vpop.f32.mrf.mxu0
    %v317 = vadd.f32 0.0, %v316
    %318 = vmatmul.f32.gmra.mxu0 %v82
    %v319 = vpop.f32.mrf.mxu0
    %v320 = vadd.f32 0.0, %v319
    %321 = vmatmul.f32.gmra.mxu0 %v83
    %v322 = vpop.f32.mrf.mxu0
    %v323 = vadd.f32 0.0, %v322
    %324 = vmatmul.f32.gmra.mxu0 %v84
    %v325 = vpop.f32.mrf.mxu0
    %v326 = vadd.f32 0.0, %v325
    %327 = vmatmul.f32.gmra.mxu0 %v85
    %v328 = vpop.f32.mrf.mxu0
    %v329 = vadd.f32 0.0, %v328
    %330 = vmatmul.f32.gmra.mxu0 %v86
    %v331 = vpop.f32.mrf.mxu0
    %v332 = vadd.f32 0.0, %v331
    %333 = vmatmul.f32.gmra.mxu0 %v87
    %v334 = vpop.f32.mrf.mxu0
    %v335 = vadd.f32 0.0, %v334
    %336 = vmatmul.f32.gmra.mxu0 %v88
    %v337 = vpop.f32.mrf.mxu0
    %v338 = vadd.f32 0.0, %v337
    %339 = vmatmul.f32.gmra.mxu0 %v89
    %v340 = vpop.f32.mrf.mxu0
    %v341 = vadd.f32 0.0, %v340
    %342 = vmatmul.f32.gmra.mxu0 %v90
    %v343 = vpop.f32.mrf.mxu0
    %v344 = vadd.f32 0.0, %v343
    %345 = vmatmul.f32.gmra.mxu0 %v91
    %v346 = vpop.f32.mrf.mxu0
    %v347 = vadd.f32 0.0, %v346
    %348 = vmatmul.f32.gmra.mxu0 %v92
    %v349 = vpop.f32.mrf.mxu0
    %v350 = vadd.f32 0.0, %v349
    %351 = vmatmul.f32.gmra.mxu0 %v93
    %v352 = vpop.f32.mrf.mxu0
    %v353 = vadd.f32 0.0, %v352
    %354 = vmatmul.f32.gmra.mxu0 %v94
    %v355 = vpop.f32.mrf.mxu0
    %v356 = vadd.f32 0.0, %v355
    %357 = vmatmul.f32.gmra.mxu0 %v95
    %v358 = vpop.f32.mrf.mxu0
    %v359 = vadd.f32 0.0, %v358
    %360 = vmatmul.f32.gmra.mxu0 %v96
    %v361 = vpop.f32.mrf.mxu0
    %v362 = vadd.f32 0.0, %v361
    %363 = vmatmul.f32.gmra.mxu0 %v97
    %v364 = vpop.f32.mrf.mxu0
    %v365 = vadd.f32 0.0, %v364
    %366 = vmatmul.f32.gmra.mxu0 %v98
    %v367 = vpop.f32.mrf.mxu0
    %v368 = vadd.f32 0.0, %v367
    %369 = vmatmul.f32.gmra.mxu0 %v99
    %v370 = vpop.f32.mrf.mxu0
    %v371 = vadd.f32 0.0, %v370
    %372 = vmatmul.f32.gmra.mxu0 %v100
    %v373 = vpop.f32.mrf.mxu0
    %v374 = vadd.f32 0.0, %v373
    %375 = vmatmul.f32.gmra.mxu0 %v101
    %v376 = vpop.f32.mrf.mxu0
    %v377 = vadd.f32 0.0, %v376
    %378 = vmatmul.f32.gmra.mxu0 %v102
    %v379 = vpop.f32.mrf.mxu0
    %v380 = vadd.f32 0.0, %v379
    %381 = vmatmul.f32.gmra.mxu0 %v103
    %v382 = vpop.f32.mrf.mxu0
    %v383 = vadd.f32 0.0, %v382
    %384 = vmatmul.f32.gmra.mxu0 %v104
    %v385 = vpop.f32.mrf.mxu0
    %v386 = vadd.f32 0.0, %v385
    %387 = vmatmul.f32.gmra.mxu0 %v105
    %v388 = vpop.f32.mrf.mxu0
    %v389 = vadd.f32 0.0, %v388
    %390 = vmatmul.f32.gmra.mxu0 %v106
    %v391 = vpop.f32.mrf.mxu0
    %v392 = vadd.f32 0.0, %v391
    %393 = vmatmul.f32.gmra.mxu0 %v107
    %v394 = vpop.f32.mrf.mxu0
    %v395 = vadd.f32 0.0, %v394
    %396 = vmatmul.f32.gmra.mxu0 %v108
    %v397 = vpop.f32.mrf.mxu0
    %v398 = vadd.f32 0.0, %v397
    %399 = vmatmul.f32.gmra.mxu0 %v109
    %v400 = vpop.f32.mrf.mxu0
    %v401 = vadd.f32 0.0, %v400
    %402 = vmatmul.f32.gmra.mxu0 %v110
    %v403 = vpop.f32.mrf.mxu0
    %v404 = vadd.f32 0.0, %v403
    %405 = vmatmul.f32.gmra.mxu0 %v111
    %v406 = vpop.f32.mrf.mxu0
    %v407 = vadd.f32 0.0, %v406
    %408 = vmatmul.f32.gmra.mxu0 %v112
    %v409 = vpop.f32.mrf.mxu0
    %v410 = vadd.f32 0.0, %v409
    %411 = vmatmul.f32.gmra.mxu0 %v113
    %v412 = vpop.f32.mrf.mxu0
    %v413 = vadd.f32 0.0, %v412
    %414 = vmatmul.f32.gmra.mxu0 %v114
    %v415 = vpop.f32.mrf.mxu0
    %v416 = vadd.f32 0.0, %v415
    %417 = vmatmul.f32.gmra.mxu0 %v115
    %v418 = vpop.f32.mrf.mxu0
    %v419 = vadd.f32 0.0, %v418
    %420 = vmatmul.f32.gmra.mxu0 %v116
    %v421 = vpop.f32.mrf.mxu0
    %v422 = vadd.f32 0.0, %v421
    %423 = vmatmul.f32.gmra.mxu0 %v117
    %v424 = vpop.f32.mrf.mxu0
    %v425 = vadd.f32 0.0, %v424
    %426 = vmatmul.f32.gmra.mxu0 %v118
    %v427 = vpop.f32.mrf.mxu0
    %v428 = vadd.f32 0.0, %v427
    %429 = vmatmul.f32.gmra.mxu0 %v119
    %v430 = vpop.f32.mrf.mxu0
    %v431 = vadd.f32 0.0, %v430
    %432 = vmatmul.f32.gmra.mxu0 %v120
    %v433 = vpop.f32.mrf.mxu0
    %v434 = vadd.f32 0.0, %v433
    %435 = vmatmul.f32.gmra.mxu0 %v121
    %v436 = vpop.f32.mrf.mxu0
    %v437 = vadd.f32 0.0, %v436
    %438 = vmatmul.f32.gmra.mxu0 %v122
    %v439 = vpop.f32.mrf.mxu0
    %v440 = vadd.f32 0.0, %v439
    %441 = vmatmul.f32.gmra.mxu0 %v123
    %v442 = vpop.f32.mrf.mxu0
    %v443 = vadd.f32 0.0, %v442
    %444 = vmatmul.f32.gmra.mxu0 %v124
    %v445 = vpop.f32.mrf.mxu0
    %v446 = vadd.f32 0.0, %v445
    %447 = vmatmul.f32.gmra.mxu0 %v125
    %v448 = vpop.f32.mrf.mxu0
    %v449 = vadd.f32 0.0, %v448
    %450 = vmatmul.f32.gmra.mxu0 %v126
    %v451 = vpop.f32.mrf.mxu0
    %v452 = vadd.f32 0.0, %v451
    %453 = vmatmul.f32.gmra.mxu0 %v127
    %v454 = vpop.f32.mrf.mxu0
    %v455 = vadd.f32 0.0, %v454
    %456 = vmatmul.f32.gmra.mxu0 %v128
    %v457 = vpop.f32.mrf.mxu0
    %v458 = vadd.f32 0.0, %v457
    %459 = vmatmul.f32.gmra.mxu0 %v129
    %v460 = vpop.f32.mrf.mxu0
    %v461 = vadd.f32 0.0, %v460
    %462 = vmatmul.f32.gmra.mxu0 %v130
    %v463 = vpop.f32.mrf.mxu0
    %v464 = vadd.f32 0.0, %v463
    %465 = vmatmul.f32.gmra.mxu0 %v131
    %v466 = vpop.f32.mrf.mxu0
    %v467 = vadd.f32 0.0, %v466
    %468 = vmatmul.f32.gmra.mxu0 %v132
    %v469 = vpop.f32.mrf.mxu0
    %v470 = vadd.f32 0.0, %v469
    %471 = vmatmul.f32.gmra.mxu0 %v133
    %v472 = vpop.f32.mrf.mxu0
    %v473 = vadd.f32 0.0, %v472
    %474 = vmatmul.f32.gmra.mxu0 %v134
    %v475 = vpop.f32.mrf.mxu0
    %v476 = vadd.f32 0.0, %v475
    %477 = vmatmul.f32.gmra.mxu0 %v135
    %v478 = vpop.f32.mrf.mxu0
    %v479 = vadd.f32 0.0, %v478
    %480 = vmatmul.f32.gmra.mxu0 %v136
    %v481 = vpop.f32.mrf.mxu0
    %v482 = vadd.f32 0.0, %v481
    %483 = vmatmul.f32.gmra.mxu0 %v137
    %v484 = vpop.f32.mrf.mxu0
    %v485 = vadd.f32 0.0, %v484
    %486 = vmatmul.f32.gmra.mxu0 %v138
    %v487 = vpop.f32.mrf.mxu0
    %v488 = vadd.f32 0.0, %v487
    %489 = vmatmul.f32.gmra.mxu0 %v139
    %v490 = vpop.f32.mrf.mxu0
    %v491 = vadd.f32 0.0, %v490
    %492 = vmatmul.f32.gmra.mxu0 %v140
    %v493 = vpop.f32.mrf.mxu0
    %v494 = vadd.f32 0.0, %v493
    %495 = vmatmul.f32.gmra.mxu0 %v141
    %v496 = vpop.f32.mrf.mxu0
    %v497 = vadd.f32 0.0, %v496
    %498 = vmatmul.f32.gmra.mxu0 %v142
    %v499 = vpop.f32.mrf.mxu0
    %v500 = vadd.f32 0.0, %v499
    %501 = vmatmul.f32.gmra.mxu0 %v143
    %v502 = vpop.f32.mrf.mxu0
    %v503 = vadd.f32 0.0, %v502
    %504 = vmatmul.f32.gmra.mxu0 %v144
    %v505 = vpop.f32.mrf.mxu0
    %v506 = vadd.f32 0.0, %v505
    %507 = vmatmul.f32.gmra.mxu0 %v145
    %v508 = vpop.f32.mrf.mxu0
    %v509 = vadd.f32 0.0, %v508
    %510 = vmatmul.f32.gmra.mxu0 %v146
    %v511 = vpop.f32.mrf.mxu0
    %v512 = vadd.f32 0.0, %v511
    %513 = vmatmul.f32.gmra.mxu0 %v147
    %v514 = vpop.f32.mrf.mxu0
    %v515 = vadd.f32 0.0, %v514
    %516 = vmatmul.f32.gmra.mxu0 %v148
    %v517 = vpop.f32.mrf.mxu0
    %v518 = vadd.f32 0.0, %v517
    %519 = vmatmul.f32.gmra.mxu0 %v149
    %v520 = vpop.f32.mrf.mxu0
    %v521 = vadd.f32 0.0, %v520
    %522 = vmatmul.f32.gmra.mxu0 %v150
    %v523 = vpop.f32.mrf.mxu0
    %v524 = vadd.f32 0.0, %v523
    %525 = vmatmul.f32.gmra.mxu0 %v151
    %v526 = vpop.f32.mrf.mxu0
    %v527 = vadd.f32 0.0, %v526
    %528 = vmatmul.f32.gmra.mxu0 %v152
    %v529 = vpop.f32.mrf.mxu0
    %v530 = vadd.f32 0.0, %v529
    %531 = vmatmul.f32.gmra.mxu0 %v153
    %v532 = vpop.f32.mrf.mxu0
    %v533 = vadd.f32 0.0, %v532
    %534 = vmatmul.f32.gmra.mxu0 %v154
    %v535 = vpop.f32.mrf.mxu0
    %v536 = vadd.f32 0.0, %v535
    %537 = vmatmul.f32.gmra.mxu0 %v155
    %v538 = vpop.f32.mrf.mxu0
    %v539 = vadd.f32 0.0, %v538
    %540 = vmatmul.f32.gmra.mxu0 %v156
    %v541 = vpop.f32.mrf.mxu0
    %v542 = vadd.f32 0.0, %v541
    %543 = vmatmul.f32.gmra.mxu0 %v157
    %v544 = vpop.f32.mrf.mxu0
    %v545 = vadd.f32 0.0, %v544
    %546 = vmatmul.f32.gmra.mxu0 %v158
    %v547 = vpop.f32.mrf.mxu0
    %v548 = vadd.f32 0.0, %v547
    %549 = vmatmul.f32.gmra.mxu0 %v159
    %v550 = vpop.f32.mrf.mxu0
    %v551 = vadd.f32 0.0, %v550
    %552 = vmatmul.f32.gmra.mxu0 %v160
    %v553 = vpop.f32.mrf.mxu0
    %v554 = vadd.f32 0.0, %v553
    %555 = vmatmul.f32.gmra.mxu0 %v161
    %v556 = vpop.f32.mrf.mxu0
    %v557 = vadd.f32 0.0, %v556
    %558 = vmatmul.f32.gmra.mxu0 %v162
    %v559 = vpop.f32.mrf.mxu0
    %v560 = vadd.f32 0.0, %v559
    %561 = vmatmul.f32.gmra.mxu0 %v163
    %v562 = vpop.f32.mrf.mxu0
    %v563 = vadd.f32 0.0, %v562
    %564 = vmatmul.f32.gmra.mxu0 %v164
    %v565 = vpop.f32.mrf.mxu0
    %v566 = vadd.f32 0.0, %v565
    %567 = vmatmul.f32.gmra.mxu0 %v165
    %v568 = vpop.f32.mrf.mxu0
    %v569 = vadd.f32 0.0, %v568
    %570 = vmatmul.f32.gmra.mxu0 %v166
    %v571 = vpop.f32.mrf.mxu0
    %v572 = vadd.f32 0.0, %v571
    %573 = vmatmul.f32.gmra.mxu0 %v167
    %v574 = vpop.f32.mrf.mxu0
    %v575 = vadd.f32 0.0, %v574
    %576 = vmatmul.f32.gmra.mxu0 %v168
    %v577 = vpop.f32.mrf.mxu0
    %v578 = vadd.f32 0.0, %v577
    %579 = vmatmul.f32.gmra.mxu0 %v169
    %v580 = vpop.f32.mrf.mxu0
    %v581 = vadd.f32 0.0, %v580
    %582 = vmatmul.f32.gmra.mxu0 %v170
    %v583 = vpop.f32.mrf.mxu0
    %v584 = vadd.f32 0.0, %v583
    %585 = vmatmul.f32.gmra.mxu0 %v171
    %v586 = vpop.f32.mrf.mxu0
    %v587 = vadd.f32 0.0, %v586
    %588 = vdwg.mxu0
    %589 = vst [vmem:[#allocation7] sm:$0xff] %v206
    %590 = vst [vmem:[#allocation7 + $0x8] sm:$0xff] %v209
    %591 = vst [vmem:[#allocation7 + $0x10] sm:$0xff] %v212
    %592 = vst [vmem:[#allocation7 + $0x18] sm:$0xff] %v215
    %593 = vst [vmem:[#allocation7 + $0x20] sm:$0xff] %v218
    %594 = vst [vmem:[#allocation7 + $0x28] sm:$0xff] %v221
    %595 = vst [vmem:[#allocation7 + $0x30] sm:$0xff] %v224
    %596 = vst [vmem:[#allocation7 + $0x38] sm:$0xff] %v227
    %597 = vst [vmem:[#allocation7 + $0x40] sm:$0xff] %v230
    %598 = vst [vmem:[#allocation7 + $0x48] sm:$0xff] %v233
    %599 = vst [vmem:[#allocation7 + $0x50] sm:$0xff] %v236
    %600 = vst [vmem:[#allocation7 + $0x58] sm:$0xff] %v239
    %601 = vst [vmem:[#allocation7 + $0x60] sm:$0xff] %v242
    %602 = vst [vmem:[#allocation7 + $0x68] sm:$0xff] %v245
    %603 = vst [vmem:[#allocation7 + $0x70] sm:$0xff] %v248
    %604 = vst [vmem:[#allocation7 + $0x78] sm:$0xff] %v251
    %605 = vst [vmem:[#allocation7 + $0x80] sm:$0xff] %v254
    %606 = vst [vmem:[#allocation7 + $0x88] sm:$0xff] %v257
    %607 = vst [vmem:[#allocation7 + $0x90] sm:$0xff] %v260
    %608 = vst [vmem:[#allocation7 + $0x98] sm:$0xff] %v263
    %609 = vst [vmem:[#allocation7 + $0xa0] sm:$0xff] %v266
    %610 = vst [vmem:[#allocation7 + $0xa8] sm:$0xff] %v269
    %611 = vst [vmem:[#allocation7 + $0xb0] sm:$0xff] %v272
    %612 = vst [vmem:[#allocation7 + $0xb8] sm:$0xff] %v275
    %613 = vst [vmem:[#allocation7 + $0xc0] sm:$0xff] %v278
    %614 = vst [vmem:[#allocation7 + $0xc8] sm:$0xff] %v281
    %615 = vst [vmem:[#allocation7 + $0xd0] sm:$0xff] %v284
    %616 = vst [vmem:[#allocation7 + $0xd8] sm:$0xff] %v287
    %617 = vst [vmem:[#allocation7 + $0xe0] sm:$0xff] %v290
    %618 = vst [vmem:[#allocation7 + $0xe8] sm:$0xff] %v293
    %619 = vst [vmem:[#allocation7 + $0xf0] sm:$0xff] %v296
    %620 = vst [vmem:[#allocation7 + $0xf8] sm:$0xff] %v299
    %621 = vst [vmem:[#allocation7 + $0x100] sm:$0xff] %v302
    %622 = vst [vmem:[#allocation7 + $0x108] sm:$0xff] %v305
    %623 = vst [vmem:[#allocation7 + $0x110] sm:$0xff] %v308
    %624 = vst [vmem:[#allocation7 + $0x118] sm:$0xff] %v311
    %625 = vst [vmem:[#allocation7 + $0x120] sm:$0xff] %v314
    %626 = vst [vmem:[#allocation7 + $0x128] sm:$0xff] %v317
    %627 = vst [vmem:[#allocation7 + $0x130] sm:$0xff] %v320
    %628 = vst [vmem:[#allocation7 + $0x138] sm:$0xff] %v323
    %629 = vst [vmem:[#allocation7 + $0x140] sm:$0xff] %v326
    %630 = vst [vmem:[#allocation7 + $0x148] sm:$0xff] %v329
    %631 = vst [vmem:[#allocation7 + $0x150] sm:$0xff] %v332
    %632 = vst [vmem:[#allocation7 + $0x158] sm:$0xff] %v335
    %633 = vst [vmem:[#allocation7 + $0x160] sm:$0xff] %v338
    %634 = vst [vmem:[#allocation7 + $0x168] sm:$0xff] %v341
    %635 = vst [vmem:[#allocation7 + $0x170] sm:$0xff] %v344
    %636 = vst [vmem:[#allocation7 + $0x178] sm:$0xff] %v347
    %637 = vst [vmem:[#allocation7 + $0x180] sm:$0xff] %v350
    %638 = vst [vmem:[#allocation7 + $0x188] sm:$0xff] %v353
    %639 = vst [vmem:[#allocation7 + $0x190] sm:$0xff] %v356
    %640 = vst [vmem:[#allocation7 + $0x198] sm:$0xff] %v359
    %641 = vst [vmem:[#allocation7 + $0x1a0] sm:$0xff] %v362
    %642 = vst [vmem:[#allocation7 + $0x1a8] sm:$0xff] %v365
    %643 = vst [vmem:[#allocation7 + $0x1b0] sm:$0xff] %v368
    %644 = vst [vmem:[#allocation7 + $0x1b8] sm:$0xff] %v371
    %645 = vst [vmem:[#allocation7 + $0x1c0] sm:$0xff] %v374
    %646 = vst [vmem:[#allocation7 + $0x1c8] sm:$0xff] %v377
    %647 = vst [vmem:[#allocation7 + $0x1d0] sm:$0xff] %v380
    %648 = vst [vmem:[#allocation7 + $0x1d8] sm:$0xff] %v383
    %649 = vst [vmem:[#allocation7 + $0x1e0] sm:$0xff] %v386
    %650 = vst [vmem:[#allocation7 + $0x1e8] sm:$0xff] %v389
    %651 = vst [vmem:[#allocation7 + $0x1f0] sm:$0xff] %v392
    %652 = vst [vmem:[#allocation7 + $0x1f8] sm:$0xff] %v395
    %653 = vst [vmem:[#allocation7 + $0x200] sm:$0xff] %v398
    %654 = vst [vmem:[#allocation7 + $0x208] sm:$0xff] %v401
    %655 = vst [vmem:[#allocation7 + $0x210] sm:$0xff] %v404
    %656 = vst [vmem:[#allocation7 + $0x218] sm:$0xff] %v407
    %657 = vst [vmem:[#allocation7 + $0x220] sm:$0xff] %v410
    %658 = vst [vmem:[#allocation7 + $0x228] sm:$0xff] %v413
    %659 = vst [vmem:[#allocation7 + $0x230] sm:$0xff] %v416
    %660 = vst [vmem:[#allocation7 + $0x238] sm:$0xff] %v419
    %661 = vst [vmem:[#allocation7 + $0x240] sm:$0xff] %v422
    %662 = vst [vmem:[#allocation7 + $0x248] sm:$0xff] %v425
    %663 = vst [vmem:[#allocation7 + $0x250] sm:$0xff] %v428
    %664 = vst [vmem:[#allocation7 + $0x258] sm:$0xff] %v431
    %665 = vst [vmem:[#allocation7 + $0x260] sm:$0xff] %v434
    %666 = vst [vmem:[#allocation7 + $0x268] sm:$0xff] %v437
    %667 = vst [vmem:[#allocation7 + $0x270] sm:$0xff] %v440
    %668 = vst [vmem:[#allocation7 + $0x278] sm:$0xff] %v443
    %669 = vst [vmem:[#allocation7 + $0x280] sm:$0xff] %v446
    %670 = vst [vmem:[#allocation7 + $0x288] sm:$0xff] %v449
    %671 = vst [vmem:[#allocation7 + $0x290] sm:$0xff] %v452
    %672 = vst [vmem:[#allocation7 + $0x298] sm:$0xff] %v455
    %673 = vst [vmem:[#allocation7 + $0x2a0] sm:$0xff] %v458
    %674 = vst [vmem:[#allocation7 + $0x2a8] sm:$0xff] %v461
    %675 = vst [vmem:[#allocation7 + $0x2b0] sm:$0xff] %v464
    %676 = vst [vmem:[#allocation7 + $0x2b8] sm:$0xff] %v467
    %677 = vst [vmem:[#allocation7 + $0x2c0] sm:$0xff] %v470
    %678 = vst [vmem:[#allocation7 + $0x2c8] sm:$0xff] %v473
    %679 = vst [vmem:[#allocation7 + $0x2d0] sm:$0xff] %v476
    %680 = vst [vmem:[#allocation7 + $0x2d8] sm:$0xff] %v479
    %681 = vst [vmem:[#allocation7 + $0x2e0] sm:$0xff] %v482
    %682 = vst [vmem:[#allocation7 + $0x2e8] sm:$0xff] %v485
    %683 = vst [vmem:[#allocation7 + $0x2f0] sm:$0xff] %v488
    %684 = vst [vmem:[#allocation7 + $0x2f8] sm:$0xff] %v491
    %685 = vst [vmem:[#allocation7 + $0x300] sm:$0xff] %v494
    %686 = vst [vmem:[#allocation7 + $0x308] sm:$0xff] %v497
    %687 = vst [vmem:[#allocation7 + $0x310] sm:$0xff] %v500
    %688 = vst [vmem:[#allocation7 + $0x318] sm:$0xff] %v503
    %689 = vst [vmem:[#allocation7 + $0x320] sm:$0xff] %v506
    %690 = vst [vmem:[#allocation7 + $0x328] sm:$0xff] %v509
    %691 = vst [vmem:[#allocation7 + $0x330] sm:$0xff] %v512
    %692 = vst [vmem:[#allocation7 + $0x338] sm:$0xff] %v515
    %693 = vst [vmem:[#allocation7 + $0x340] sm:$0xff] %v518
    %694 = vst [vmem:[#allocation7 + $0x348] sm:$0xff] %v521
    %695 = vst [vmem:[#allocation7 + $0x350] sm:$0xff] %v524
    %696 = vst [vmem:[#allocation7 + $0x358] sm:$0xff] %v527
    %697 = vst [vmem:[#allocation7 + $0x360] sm:$0xff] %v530
    %698 = vst [vmem:[#allocation7 + $0x368] sm:$0xff] %v533
    %699 = vst [vmem:[#allocation7 + $0x370] sm:$0xff] %v536
    %700 = vst [vmem:[#allocation7 + $0x378] sm:$0xff] %v539
    %701 = vst [vmem:[#allocation7 + $0x380] sm:$0xff] %v542
    %702 = vst [vmem:[#allocation7 + $0x388] sm:$0xff] %v545
    %703 = vst [vmem:[#allocation7 + $0x390] sm:$0xff] %v548
    %704 = vst [vmem:[#allocation7 + $0x398] sm:$0xff] %v551
    %705 = vst [vmem:[#allocation7 + $0x3a0] sm:$0xff] %v554
    %706 = vst [vmem:[#allocation7 + $0x3a8] sm:$0xff] %v557
    %707 = vst [vmem:[#allocation7 + $0x3b0] sm:$0xff] %v560
    %708 = vst [vmem:[#allocation7 + $0x3b8] sm:$0xff] %v563
    %709 = vst [vmem:[#allocation7 + $0x3c0] sm:$0xff] %v566
    %710 = vst [vmem:[#allocation7 + $0x3c8] sm:$0xff] %v569
    %711 = vst [vmem:[#allocation7 + $0x3d0] sm:$0xff] %v572
    %712 = vst [vmem:[#allocation7 + $0x3d8] sm:$0xff] %v575
    %713 = vst [vmem:[#allocation7 + $0x3e0] sm:$0xff] %v578
    %714 = vst [vmem:[#allocation7 + $0x3e8] sm:$0xff] %v581
    %715 = vst [vmem:[#allocation7 + $0x3f0] sm:$0xff] %v584
    %716 = vst [vmem:[#allocation7 + $0x3f8] sm:$0xff] %v587
    // Predicated region
    $region18: #{tpu_custom_call.1} parent=1 // pred_check
      _
    $region19: #{tpu_custom_call.1} parent=1 // pred_check_branch
      %718 = sbr.rel (0) target = $region21
    $region20: #{tpu_custom_call.1} parent=1 // pred_region
      %720 = vsyncadd [#allocation4], 0
      %s721 = sshll.u32 [#allocation7], 4
      %s722 = int_to_ptr.vmem [resolvable:$true] %s721
      %s723 = sshll.u32 %s2, 4
      %s724 = int_to_ptr.hbm [resolvable:$true] %s723
      %729 = dma.vmem_to_hbm [thread:$0]  %s722, 16384, %s724, [#allocation4], 128, 128, 8
    $region21: #{tpu_custom_call.1} parent=1 // pred_fallthru
      _
    // Predicated region
    $region22: #{tpu_custom_call.1} parent=1 // pred_check
      _
    $region23: #{tpu_custom_call.1} parent=1 // pred_check_branch
      %731 = sbr.rel (0) target = $region25
    $region24: #{tpu_custom_call.1} parent=1 // pred_region
      %733 = dma.done [#allocation4], 16384
    $region25: #{tpu_custom_call.1} parent=1 // pred_fallthru
      _
    %734 = vsyncpa [#allocation3], 1
    %735 = vsyncpa [#allocation6], 1
    %736 = vsyncpa [#allocation4], 1

</llo_original>
